<compile_context>
chip_gen: v7x
topology: tpu7x:2x2x1
jax: 0.10.0
libtpu: 0.0.40
codegen_flags: <defaults>
</compile_context>

<pallas_src>
import functools

import jax
import jax.numpy as jnp
from jax import lax
from jax.experimental import pallas as pl
from jax.experimental.pallas import tpu as pltpu


# ----------------------------------------------------------------------------
# Pallas kernel: one fused (matmul + bias) per conv group.
# ----------------------------------------------------------------------------
def _matmul_bias_kernel(x_ref, w_ref, b_ref, o_ref):
    # x_ref: (TM, K)  w_ref: (K, N)  b_ref: (1, N)  o_ref: (TM, N)
    o_ref[...] = (
        jnp.dot(x_ref[...], w_ref[...], preferred_element_type=jnp.float32)
        + b_ref[...]
    ).astype(o_ref.dtype)


@functools.lru_cache(maxsize=None)
def _get_matmul_bias_call(M_pad, K, N, TM):
    grid = (M_pad // TM,)
    return pl.pallas_call(
        _matmul_bias_kernel,
        out_shape=jax.ShapeDtypeStruct((M_pad, N), jnp.float32),
        grid_spec=pltpu.PrefetchScalarGridSpec(
            num_scalar_prefetch=0,
            grid=grid,
            in_specs=[
                pl.BlockSpec((TM, K), lambda i: (i, 0)),   # row tile of im2col
                pl.BlockSpec((K, N), lambda i: (0, 0)),    # fused weight (resident)
                pl.BlockSpec((1, N), lambda i: (0, 0)),    # fused bias   (resident)
            ],
            out_specs=pl.BlockSpec((TM, N), lambda i: (i, 0)),
        ),
        compiler_params=pltpu.CompilerParams(
            dimension_semantics=("parallel",)),   # row tiles are independent
    )


def _round_up(x, m):
    return (x + m - 1) // m * m


def _fused_conv_hwc(x_hwc, w_cat, b_cat, KH, KW, pad, dil):
    """Dilated stride-1 conv of an HWC input against a fused (K, N) weight.

    Performs im2col (cheap strided slices) in the wrapper and one big Pallas
    matmul: (Ho*Wo, KH*KW*Cin) @ (KH*KW*Cin, N) + bias.
    """
    H, W, Cin = x_hwc.shape
    ph, pw = pad
    dh, dw = dil
    xp = jnp.pad(x_hwc, ((ph, ph), (pw, pw), (0, 0)))
    Hp, Wp = H + 2 * ph, W + 2 * pw
    Ho = Hp - dh * (KH - 1)
    Wo = Wp - dw * (KW - 1)
    K = KH * KW * Cin
    N = w_cat.shape[1]

    # im2col with tap-major feature ordering, matching the
    # (KH, KW, Cin, Cout) -> (KH*KW*Cin, Cout) weight reshape.
    cols = []
    for kh in range(KH):
        for kw in range(KW):
            cols.append(lax.slice(xp, (kh * dh, kw * dw, 0),
                                  (kh * dh + Ho, kw * dw + Wo, Cin)))
    x_col = jnp.concatenate(cols, axis=-1).reshape(Ho * Wo, K)

    M = Ho * Wo
    TM = min(512, _round_up(M, 8))
    M_pad = _round_up(M, TM)
    if M_pad != M:
        x_col = jnp.pad(x_col, ((0, M_pad - M), (0, 0)))

    call = _get_matmul_bias_call(M_pad, K, N, TM)
    y = call(x_col, w_cat, b_cat.reshape(1, N))
    return y[:M].reshape(Ho, Wo, N)


# ----------------------------------------------------------------------------
# Weight plumbing: expand grouped torch weights into dense HWIO weights.
# ----------------------------------------------------------------------------
def _expand_conv_weight(w, groups, cin):
    # w: (Cout, Cin//groups, KH, KW) torch Conv layout -> dense (KH, KW, Cin, Cout)
    cout, cin_g, kh, kw = w.shape
    cout_g = cout // groups
    dense = jnp.zeros((kh, kw, cin, cout), w.dtype)
    for g in range(groups):
        blk = w[g * cout_g:(g + 1) * cout_g]           # (cout_g, cin_g, kh, kw)
        blk = jnp.transpose(blk, (2, 3, 1, 0))         # (kh, kw, cin_g, cout_g)
        dense = dense.at[:, :, g * cin_g:(g + 1) * cin_g,
                         g * cout_g:(g + 1) * cout_g].set(blk)
    return dense


def _expand_convtranspose_weight(w, groups, cout):
    # w: (Cin, Cout//groups, KH, KW) torch ConvTranspose layout.
    # Equivalent-forward-conv dense weight (spatially flipped): (KH, KW, Cin, Cout)
    cin, cout_g, kh, kw = w.shape
    cin_g = cin // groups
    wf = w[:, :, ::-1, ::-1]
    dense = jnp.zeros((kh, kw, cin, cout), w.dtype)
    for g in range(groups):
        blk = wf[g * cin_g:(g + 1) * cin_g]            # (cin_g, cout_g, kh, kw)
        blk = jnp.transpose(blk, (2, 3, 0, 1))         # (kh, kw, cin_g, cout_g)
        dense = dense.at[:, :, g * cin_g:(g + 1) * cin_g,
                         g * cout_g:(g + 1) * cout_g].set(blk)
    return dense


# ----------------------------------------------------------------------------
# Reference (correctness check) using XLA's conv on the dense per-layer weights.
# ----------------------------------------------------------------------------
def _lax_dense_conv_nchw(x, dense_w, bias, pad, dil):
    w_oihw = jnp.transpose(dense_w, (3, 2, 0, 1))
    y = lax.conv_general_dilated(
        x, w_oihw, window_strides=(1, 1),
        padding=((pad[0], pad[0]), (pad[1], pad[1])),
        rhs_dilation=(dil[0], dil[1]),
        dimension_numbers=('NCHW', 'OIHW', 'NCHW'),
        precision=lax.Precision.HIGHEST)
    return y + bias[None, :, None, None]


# ----------------------------------------------------------------------------
# The module.
# ----------------------------------------------------------------------------
class MyModulePallas:
    IN_CH = 16

    def __init__(self, key):
        C = self.IN_CH
        keys = iter(jax.random.split(key, 256))

        def winit(shape):
            return 0.1 * jax.random.normal(next(keys), shape, jnp.float32)

        self.groups = {}       # fuse key -> dict(src, KH, KW, pad, dil, w, b)
        self.layer_meta = []   # in torch output order

        def add_layer(src, dense_w, bias, pad, dil):
            KH, KW, Cin, Cout = dense_w.shape
            fkey = (src, KH, KW, pad[0], pad[1], dil[0], dil[1])
            g = self.groups.setdefault(fkey, dict(
                src=src, KH=KH, KW=KW, pad=pad, dil=dil,
                w_list=[], b_list=[], n=0))
            off = g['n']
            g['w_list'].append(dense_w.reshape(KH * KW * Cin, Cout))
            g['b_list'].append(bias)
            g['n'] += Cout
            self.layer_meta.append(dict(group=fkey, src=src, off=off, cout=Cout,
                                        dense_w=dense_w, b=bias, pad=pad, dil=dil))

        # Conv2d bank: 16 layers
        for cout in [16, 32]:
            for (kh, kw) in [(3, 3)]:
                for padding in [(1, 1), 'same']:
                    for groups_ in [1, min(C, cout)]:
                        for dil in [1, 2]:
                            w = winit((cout, C // groups_, kh, kw))
                            b = winit((cout,))
                            ph = dil * (kh - 1) // 2 if padding == 'same' else padding[0]
                            pw = dil * (kw - 1) // 2 if padding == 'same' else padding[1]
                            add_layer('2d', _expand_conv_weight(w, groups_, C), b,
                                      (ph, pw), (dil, dil))

        # ConvTranspose2d bank: 8 layers (stride=1 -> expressed as forward conv)
        for cout in [16, 32]:
            for (kh, kw) in [(3, 3)]:
                for padding in [(1, 1)]:
                    for groups_ in [1, min(C, cout)]:
                        for dil in [1, 2]:
                            w = winit((C, cout // groups_, kh, kw))
                            b = winit((cout,))
                            ph = dil * (kh - 1) - padding[0]
                            pw = dil * (kw - 1) - padding[1]
                            assert ph >= 0 and pw >= 0, "transpose rewrite needs pad>=0"
                            add_layer('2d',
                                      _expand_convtranspose_weight(w, groups_, cout),
                                      b, (ph, pw), (dil, dil))

        # Conv1d bank: 16 layers (handled as 2-D with KH=1)
        for cout in [16, 32]:
            for k in [3]:
                for padding in [1, 'same']:
                    for groups_ in [1, min(C, cout)]:
                        for dil in [1, 2]:
                            w = winit((cout, C // groups_, k))
                            b = winit((cout,))
                            p = dil * (k - 1) // 2 if padding == 'same' else padding
                            add_layer('1d',
                                      _expand_conv_weight(w[:, :, None, :], groups_, C),
                                      b, (0, p), (1, dil))

        # ConvTranspose1d bank: 4 layers
        for cout in [16, 32]:
            for k in [3]:
                for padding in [1]:
                    for groups_ in [1, min(C, cout)]:
                        for dil in [1]:
                            w = winit((C, cout // groups_, k))
                            b = winit((cout,))
                            p = dil * (k - 1) - padding
                            assert p >= 0, "transpose rewrite needs pad>=0"
                            add_layer('1d',
                                      _expand_convtranspose_weight(
                                          w[:, :, None, :], groups_, cout),
                                      b, (0, p), (1, dil))

        # Finalize fused weights / biases per group.
        for g in self.groups.values():
            g['w'] = jnp.concatenate(g['w_list'], axis=1)   # (KH*KW*Cin, sum_Cout)
            g['b'] = jnp.concatenate(g['b_list'], axis=0)   # (sum_Cout,)
            del g['w_list'], g['b_list']

        # Whole forward in a single jit (transposes + im2col + 7 pallas_calls).
        self._fwd = jax.jit(self._forward_impl)

    # ------------------------------------------------------------------
    def _forward_impl(self, x):
        # x: (1, 16, H, W) float32 in PyTorch NCHW order.
        b, c, h, w = x.shape
        x_hwc = jnp.transpose(x[0], (1, 2, 0))         # (H, W, C)
        # x.view(b, c, h*w); nobuco.force_tensorflow_order is a layout hint only
        # (identity on values), so nothing to compute for it.
        x1_hwc = x_hwc.reshape(1, h * w, c)            # (1, L, C)

        group_out = {}
        for fkey, g in self.groups.items():
            src = x_hwc if g['src'] == '2d' else x1_hwc
            group_out[fkey] = _fused_conv_hwc(src, g['w'], g['b'],
                                              g['KH'], g['KW'], g['pad'], g['dil'])

        outputs = []
        for meta in self.layer_meta:
            y = group_out[meta['group']]               # (Ho, Wo, Ntot)
            sl = y[..., meta['off']:meta['off'] + meta['cout']]
            if meta['src'] == '2d':
                outputs.append(jnp.transpose(sl, (2, 0, 1))[None])   # (1,Cout,Ho,Wo)
            else:
                outputs.append(jnp.transpose(sl[0], (1, 0))[None])   # (1,Cout,Lo)
        return outputs

    def __call__(self, x):
        return self._fwd(x)

    # ------------------------------------------------------------------
    def reference(self, x):
        outs = []
        b, c, h, w = x.shape
        x1 = x.reshape(b, c, h * w)[:, :, None, :]     # (1, C, 1, L)
        for meta in self.layer_meta:
            xin = x if meta['src'] == '2d' else x1
            y = _lax_dense_conv_nchw(xin, meta['dense_w'], meta['b'],
                                     meta['pad'], meta['dil'])
            if meta['src'] == '1d':
                y = y[:, :, 0, :]
            outs.append(y)
        return outs


if __name__ == "__main__":
    key = jax.random.PRNGKey(0)
    pkey, xkey = jax.random.split(key)
    model = MyModulePallas(pkey)

    # Small shapes consistent with the module: channels must be 16; spatial is
    # shrunk from the original 113x113 to 12x12 for a quick run.
    H = W = 12
    x = jax.random.normal(xkey, (1, 16, H, W), jnp.float32)

    outs = model(x)
    outs = jax.block_until_ready(outs)

    # Correctness check against XLA's dense dilated conv (HIGHEST precision ref).
    refs = model.reference(x)
    assert len(outs) == 44
    for o, r in zip(outs, refs):
        assert o.shape == r.shape, (o.shape, r.shape)
        err = float(jnp.max(jnp.abs(o - r)))
        assert err < 5e-2, err

    print("KERNEL_OK")
</pallas_src>

<mosaic_0001>
module attributes {stable_mosaic.version = 11 : i64} {
  func.func @_matmul_bias_kernel(%arg0: i32, %arg1: memref<144x144xf32, #tpu.memory_space<vmem>>, %arg2: memref<144x288xf32, #tpu.memory_space<vmem>>, %arg3: memref<1x288xf32, #tpu.memory_space<vmem>>, %arg4: memref<144x288xf32, #tpu.memory_space<vmem>>) attributes {dimension_semantics = [#tpu.dimension_semantics<parallel>], iteration_bounds = array<i64: 1>, scalar_prefetch = 0 : i64, scratch_operands = 0 : i64, tpu.core_type = #tpu.core_type<tc>, window_params = [{transform_indices = @transform_0, window_bounds = array<i64: 144, 144>}, {pipeline_mode = #tpu.pipeline_mode<synchronous>, transform_indices = @transform_1, window_bounds = array<i64: 144, 288>}, {pipeline_mode = #tpu.pipeline_mode<synchronous>, transform_indices = @transform_2, window_bounds = array<i64: 1, 288>}, {transform_indices = @transform_3, window_bounds = array<i64: 144, 288>}]} {
    %c0 = arith.constant 0 : index
    %c0_0 = arith.constant 0 : index
    %0 = vector.load %arg1[%c0, %c0_0] : memref<144x144xf32, #tpu.memory_space<vmem>>, vector<144x144xf32>
    %c0_1 = arith.constant 0 : index
    %c0_2 = arith.constant 0 : index
    %1 = vector.load %arg2[%c0_1, %c0_2] : memref<144x288xf32, #tpu.memory_space<vmem>>, vector<144x288xf32>
    %cst = arith.constant dense<0.000000e+00> : vector<144x288xf32>
    %2 = tpu.matmul %0, %1, %cst {dimension_numbers = #tpu.dot_dimension_numbers<[1], [0], [0], [1], [0, 0, 1, 1], [], []>} : vector<144x144xf32>, vector<144x288xf32>, vector<144x288xf32> -> vector<144x288xf32>
    %c0_3 = arith.constant 0 : index
    %c0_4 = arith.constant 0 : index
    %3 = vector.load %arg3[%c0_3, %c0_4] : memref<1x288xf32, #tpu.memory_space<vmem>>, vector<1x288xf32>
    %4 = vector.broadcast %3 : vector<1x288xf32> to vector<144x288xf32>
    %5 = arith.addf %2, %4 : vector<144x288xf32>
    %c0_5 = arith.constant 0 : index
    %c0_6 = arith.constant 0 : index
    %6 = vector.load %arg4[%c0_5, %c0_6] : memref<144x288xf32, #tpu.memory_space<vmem>>, vector<144x288xf32>
    tpu.vector_store %arg4[%c0_5, %c0_6], %5 {strides = array<i32>} : memref<144x288xf32, #tpu.memory_space<vmem>>, vector<144x288xf32>,
    return
  }
  func.func @transform_0(%arg0: i32) -> (i32, i32) {
    %c0_i32 = arith.constant 0 : i32
    %c0_i32_0 = arith.constant 0 : i32
    return %arg0, %c0_i32 : i32, i32
  }
  func.func @transform_1(%arg0: i32) -> (i32, i32) {
    %c0_i32 = arith.constant 0 : i32
    %c0_i32_0 = arith.constant 0 : i32
    %c0_i32_1 = arith.constant 0 : i32
    return %c0_i32, %c0_i32_0 : i32, i32
  }
  func.func @transform_2(%arg0: i32) -> (i32, i32) {
    %c0_i32 = arith.constant 0 : i32
    %c0_i32_0 = arith.constant 0 : i32
    %c0_i32_1 = arith.constant 0 : i32
    return %c0_i32, %c0_i32_0 : i32, i32
  }
  func.func @transform_3(%arg0: i32) -> (i32, i32) {
    %c0_i32 = arith.constant 0 : i32
    %c0_i32_0 = arith.constant 0 : i32
    return %arg0, %c0_i32 : i32, i32
  }
}

module attributes {stable_mosaic.version = 11 : i64} {
  func.func @_matmul_bias_kernel(%arg0: i32, %arg1: memref<144x144xf32, #tpu.memory_space<vmem>>, %arg2: memref<144x96xf32, #tpu.memory_space<vmem>>, %arg3: memref<1x96xf32, #tpu.memory_space<vmem>>, %arg4: memref<144x96xf32, #tpu.memory_space<vmem>>) attributes {dimension_semantics = [#tpu.dimension_semantics<parallel>], iteration_bounds = array<i64: 1>, scalar_prefetch = 0 : i64, scratch_operands = 0 : i64, tpu.core_type = #tpu.core_type<tc>, window_params = [{transform_indices = @transform_0, window_bounds = array<i64: 144, 144>}, {pipeline_mode = #tpu.pipeline_mode<synchronous>, transform_indices = @transform_1, window_bounds = array<i64: 144, 96>}, {pipeline_mode = #tpu.pipeline_mode<synchronous>, transform_indices = @transform_2, window_bounds = array<i64: 1, 96>}, {transform_indices = @transform_3, window_bounds = array<i64: 144, 96>}]} {
    %c0 = arith.constant 0 : index
    %c0_0 = arith.constant 0 : index
    %0 = vector.load %arg1[%c0, %c0_0] : memref<144x144xf32, #tpu.memory_space<vmem>>, vector<144x144xf32>
    %c0_1 = arith.constant 0 : index
    %c0_2 = arith.constant 0 : index
    %1 = vector.load %arg2[%c0_1, %c0_2] : memref<144x96xf32, #tpu.memory_space<vmem>>, vector<144x96xf32>
    %cst = arith.constant dense<0.000000e+00> : vector<144x96xf32>
    %2 = tpu.matmul %0, %1, %cst {dimension_numbers = #tpu.dot_dimension_numbers<[1], [0], [0], [1], [0, 0, 1, 1], [], []>} : vector<144x144xf32>, vector<144x96xf32>, vector<144x96xf32> -> vector<144x96xf32>
    %c0_3 = arith.constant 0 : index
    %c0_4 = arith.constant 0 : index
    %3 = vector.load %arg3[%c0_3, %c0_4] : memref<1x96xf32, #tpu.memory_space<vmem>>, vector<1x96xf32>
    %4 = vector.broadcast %3 : vector<1x96xf32> to vector<144x96xf32>
    %5 = arith.addf %2, %4 : vector<144x96xf32>
    %c0_5 = arith.constant 0 : index
    %c0_6 = arith.constant 0 : index
    %6 = vector.load %arg4[%c0_5, %c0_6] : memref<144x96xf32, #tpu.memory_space<vmem>>, vector<144x96xf32>
    tpu.vector_store %arg4[%c0_5, %c0_6], %5 {strides = array<i32>} : memref<144x96xf32, #tpu.memory_space<vmem>>, vector<144x96xf32>,
    return
  }
  func.func @transform_0(%arg0: i32) -> (i32, i32) {
    %c0_i32 = arith.constant 0 : i32
    %c0_i32_0 = arith.constant 0 : i32
    return %arg0, %c0_i32 : i32, i32
  }
  func.func @transform_1(%arg0: i32) -> (i32, i32) {
    %c0_i32 = arith.constant 0 : i32
    %c0_i32_0 = arith.constant 0 : i32
    %c0_i32_1 = arith.constant 0 : i32
    return %c0_i32, %c0_i32_0 : i32, i32
  }
  func.func @transform_2(%arg0: i32) -> (i32, i32) {
    %c0_i32 = arith.constant 0 : i32
    %c0_i32_0 = arith.constant 0 : i32
    %c0_i32_1 = arith.constant 0 : i32
    return %c0_i32, %c0_i32_0 : i32, i32
  }
  func.func @transform_3(%arg0: i32) -> (i32, i32) {
    %c0_i32 = arith.constant 0 : i32
    %c0_i32_0 = arith.constant 0 : i32
    return %arg0, %c0_i32 : i32, i32
  }
}

module attributes {stable_mosaic.version = 11 : i64} {
  func.func @_matmul_bias_kernel(%arg0: i32, %arg1: memref<200x144xf32, #tpu.memory_space<vmem>>, %arg2: memref<144x96xf32, #tpu.memory_space<vmem>>, %arg3: memref<1x96xf32, #tpu.memory_space<vmem>>, %arg4: memref<200x96xf32, #tpu.memory_space<vmem>>) attributes {dimension_semantics = [#tpu.dimension_semantics<parallel>], iteration_bounds = array<i64: 1>, scalar_prefetch = 0 : i64, scratch_operands = 0 : i64, tpu.core_type = #tpu.core_type<tc>, window_params = [{transform_indices = @transform_0, window_bounds = array<i64: 200, 144>}, {pipeline_mode = #tpu.pipeline_mode<synchronous>, transform_indices = @transform_1, window_bounds = array<i64: 144, 96>}, {pipeline_mode = #tpu.pipeline_mode<synchronous>, transform_indices = @transform_2, window_bounds = array<i64: 1, 96>}, {transform_indices = @transform_3, window_bounds = array<i64: 200, 96>}]} {
    %c0 = arith.constant 0 : index
    %c0_0 = arith.constant 0 : index
    %0 = vector.load %arg1[%c0, %c0_0] : memref<200x144xf32, #tpu.memory_space<vmem>>, vector<200x144xf32>
    %c0_1 = arith.constant 0 : index
    %c0_2 = arith.constant 0 : index
    %1 = vector.load %arg2[%c0_1, %c0_2] : memref<144x96xf32, #tpu.memory_space<vmem>>, vector<144x96xf32>
    %cst = arith.constant dense<0.000000e+00> : vector<200x96xf32>
    %2 = tpu.matmul %0, %1, %cst {dimension_numbers = #tpu.dot_dimension_numbers<[1], [0], [0], [1], [0, 0, 1, 1], [], []>} : vector<200x144xf32>, vector<144x96xf32>, vector<200x96xf32> -> vector<200x96xf32>
    %c0_3 = arith.constant 0 : index
    %c0_4 = arith.constant 0 : index
    %3 = vector.load %arg3[%c0_3, %c0_4] : memref<1x96xf32, #tpu.memory_space<vmem>>, vector<1x96xf32>
    %4 = vector.broadcast %3 : vector<1x96xf32> to vector<200x96xf32>
    %5 = arith.addf %2, %4 : vector<200x96xf32>
    %c0_5 = arith.constant 0 : index
    %c0_6 = arith.constant 0 : index
    %6 = vector.load %arg4[%c0_5, %c0_6] : memref<200x96xf32, #tpu.memory_space<vmem>>, vector<200x96xf32>
    tpu.vector_store %arg4[%c0_5, %c0_6], %5 {strides = array<i32>} : memref<200x96xf32, #tpu.memory_space<vmem>>, vector<200x96xf32>,
    return
  }
  func.func @transform_0(%arg0: i32) -> (i32, i32) {
    %c0_i32 = arith.constant 0 : i32
    %c0_i32_0 = arith.constant 0 : i32
    return %arg0, %c0_i32 : i32, i32
  }
  func.func @transform_1(%arg0: i32) -> (i32, i32) {
    %c0_i32 = arith.constant 0 : i32
    %c0_i32_0 = arith.constant 0 : i32
    %c0_i32_1 = arith.constant 0 : i32
    return %c0_i32, %c0_i32_0 : i32, i32
  }
  func.func @transform_2(%arg0: i32) -> (i32, i32) {
    %c0_i32 = arith.constant 0 : i32
    %c0_i32_0 = arith.constant 0 : i32
    %c0_i32_1 = arith.constant 0 : i32
    return %c0_i32, %c0_i32_0 : i32, i32
  }
  func.func @transform_3(%arg0: i32) -> (i32, i32) {
    %c0_i32 = arith.constant 0 : i32
    %c0_i32_0 = arith.constant 0 : i32
    return %arg0, %c0_i32 : i32, i32
  }
}

module attributes {stable_mosaic.version = 11 : i64} {
  func.func @_matmul_bias_kernel(%arg0: i32, %arg1: memref<104x144xf32, #tpu.memory_space<vmem>>, %arg2: memref<144x96xf32, #tpu.memory_space<vmem>>, %arg3: memref<1x96xf32, #tpu.memory_space<vmem>>, %arg4: memref<104x96xf32, #tpu.memory_space<vmem>>) attributes {dimension_semantics = [#tpu.dimension_semantics<parallel>], iteration_bounds = array<i64: 1>, scalar_prefetch = 0 : i64, scratch_operands = 0 : i64, tpu.core_type = #tpu.core_type<tc>, window_params = [{transform_indices = @transform_0, window_bounds = array<i64: 104, 144>}, {pipeline_mode = #tpu.pipeline_mode<synchronous>, transform_indices = @transform_1, window_bounds = array<i64: 144, 96>}, {pipeline_mode = #tpu.pipeline_mode<synchronous>, transform_indices = @transform_2, window_bounds = array<i64: 1, 96>}, {transform_indices = @transform_3, window_bounds = array<i64: 104, 96>}]} {
    %c0 = arith.constant 0 : index
    %c0_0 = arith.constant 0 : index
    %0 = vector.load %arg1[%c0, %c0_0] : memref<104x144xf32, #tpu.memory_space<vmem>>, vector<104x144xf32>
    %c0_1 = arith.constant 0 : index
    %c0_2 = arith.constant 0 : index
    %1 = vector.load %arg2[%c0_1, %c0_2] : memref<144x96xf32, #tpu.memory_space<vmem>>, vector<144x96xf32>
    %cst = arith.constant dense<0.000000e+00> : vector<104x96xf32>
    %2 = tpu.matmul %0, %1, %cst {dimension_numbers = #tpu.dot_dimension_numbers<[1], [0], [0], [1], [0, 0, 1, 1], [], []>} : vector<104x144xf32>, vector<144x96xf32>, vector<104x96xf32> -> vector<104x96xf32>
    %c0_3 = arith.constant 0 : index
    %c0_4 = arith.constant 0 : index
    %3 = vector.load %arg3[%c0_3, %c0_4] : memref<1x96xf32, #tpu.memory_space<vmem>>, vector<1x96xf32>
    %4 = vector.broadcast %3 : vector<1x96xf32> to vector<104x96xf32>
    %5 = arith.addf %2, %4 : vector<104x96xf32>
    %c0_5 = arith.constant 0 : index
    %c0_6 = arith.constant 0 : index
    %6 = vector.load %arg4[%c0_5, %c0_6] : memref<104x96xf32, #tpu.memory_space<vmem>>, vector<104x96xf32>
    tpu.vector_store %arg4[%c0_5, %c0_6], %5 {strides = array<i32>} : memref<104x96xf32, #tpu.memory_space<vmem>>, vector<104x96xf32>,
    return
  }
  func.func @transform_0(%arg0: i32) -> (i32, i32) {
    %c0_i32 = arith.constant 0 : i32
    %c0_i32_0 = arith.constant 0 : i32
    return %arg0, %c0_i32 : i32, i32
  }
  func.func @transform_1(%arg0: i32) -> (i32, i32) {
    %c0_i32 = arith.constant 0 : i32
    %c0_i32_0 = arith.constant 0 : i32
    %c0_i32_1 = arith.constant 0 : i32
    return %c0_i32, %c0_i32_0 : i32, i32
  }
  func.func @transform_2(%arg0: i32) -> (i32, i32) {
    %c0_i32 = arith.constant 0 : i32
    %c0_i32_0 = arith.constant 0 : i32
    %c0_i32_1 = arith.constant 0 : i32
    return %c0_i32, %c0_i32_0 : i32, i32
  }
  func.func @transform_3(%arg0: i32) -> (i32, i32) {
    %c0_i32 = arith.constant 0 : i32
    %c0_i32_0 = arith.constant 0 : i32
    return %arg0, %c0_i32 : i32, i32
  }
}

module attributes {stable_mosaic.version = 11 : i64} {
  func.func @_matmul_bias_kernel(%arg0: i32, %arg1: memref<144x48xf32, #tpu.memory_space<vmem>>, %arg2: memref<48x288xf32, #tpu.memory_space<vmem>>, %arg3: memref<1x288xf32, #tpu.memory_space<vmem>>, %arg4: memref<144x288xf32, #tpu.memory_space<vmem>>) attributes {dimension_semantics = [#tpu.dimension_semantics<parallel>], iteration_bounds = array<i64: 1>, scalar_prefetch = 0 : i64, scratch_operands = 0 : i64, tpu.core_type = #tpu.core_type<tc>, window_params = [{transform_indices = @transform_0, window_bounds = array<i64: 144, 48>}, {pipeline_mode = #tpu.pipeline_mode<synchronous>, transform_indices = @transform_1, window_bounds = array<i64: 48, 288>}, {pipeline_mode = #tpu.pipeline_mode<synchronous>, transform_indices = @transform_2, window_bounds = array<i64: 1, 288>}, {transform_indices = @transform_3, window_bounds = array<i64: 144, 288>}]} {
    %c0 = arith.constant 0 : index
    %c0_0 = arith.constant 0 : index
    %0 = vector.load %arg1[%c0, %c0_0] : memref<144x48xf32, #tpu.memory_space<vmem>>, vector<144x48xf32>
    %c0_1 = arith.constant 0 : index
    %c0_2 = arith.constant 0 : index
    %1 = vector.load %arg2[%c0_1, %c0_2] : memref<48x288xf32, #tpu.memory_space<vmem>>, vector<48x288xf32>
    %cst = arith.constant dense<0.000000e+00> : vector<144x288xf32>
    %2 = tpu.matmul %0, %1, %cst {dimension_numbers = #tpu.dot_dimension_numbers<[1], [0], [0], [1], [0, 0, 1, 1], [], []>} : vector<144x48xf32>, vector<48x288xf32>, vector<144x288xf32> -> vector<144x288xf32>
    %c0_3 = arith.constant 0 : index
    %c0_4 = arith.constant 0 : index
    %3 = vector.load %arg3[%c0_3, %c0_4] : memref<1x288xf32, #tpu.memory_space<vmem>>, vector<1x288xf32>
    %4 = vector.broadcast %3 : vector<1x288xf32> to vector<144x288xf32>
    %5 = arith.addf %2, %4 : vector<144x288xf32>
    %c0_5 = arith.constant 0 : index
    %c0_6 = arith.constant 0 : index
    %6 = vector.load %arg4[%c0_5, %c0_6] : memref<144x288xf32, #tpu.memory_space<vmem>>, vector<144x288xf32>
    tpu.vector_store %arg4[%c0_5, %c0_6], %5 {strides = array<i32>} : memref<144x288xf32, #tpu.memory_space<vmem>>, vector<144x288xf32>,
    return
  }
  func.func @transform_0(%arg0: i32) -> (i32, i32) {
    %c0_i32 = arith.constant 0 : i32
    %c0_i32_0 = arith.constant 0 : i32
    return %arg0, %c0_i32 : i32, i32
  }
  func.func @transform_1(%arg0: i32) -> (i32, i32) {
    %c0_i32 = arith.constant 0 : i32
    %c0_i32_0 = arith.constant 0 : i32
    %c0_i32_1 = arith.constant 0 : i32
    return %c0_i32, %c0_i32_0 : i32, i32
  }
  func.func @transform_2(%arg0: i32) -> (i32, i32) {
    %c0_i32 = arith.constant 0 : i32
    %c0_i32_0 = arith.constant 0 : i32
    %c0_i32_1 = arith.constant 0 : i32
    return %c0_i32, %c0_i32_0 : i32, i32
  }
  func.func @transform_3(%arg0: i32) -> (i32, i32) {
    %c0_i32 = arith.constant 0 : i32
    %c0_i32_0 = arith.constant 0 : i32
    return %arg0, %c0_i32 : i32, i32
  }
}

module attributes {stable_mosaic.version = 11 : i64} {
  func.func @_matmul_bias_kernel(%arg0: i32, %arg1: memref<144x48xf32, #tpu.memory_space<vmem>>, %arg2: memref<48x96xf32, #tpu.memory_space<vmem>>, %arg3: memref<1x96xf32, #tpu.memory_space<vmem>>, %arg4: memref<144x96xf32, #tpu.memory_space<vmem>>) attributes {dimension_semantics = [#tpu.dimension_semantics<parallel>], iteration_bounds = array<i64: 1>, scalar_prefetch = 0 : i64, scratch_operands = 0 : i64, tpu.core_type = #tpu.core_type<tc>, window_params = [{transform_indices = @transform_0, window_bounds = array<i64: 144, 48>}, {pipeline_mode = #tpu.pipeline_mode<synchronous>, transform_indices = @transform_1, window_bounds = array<i64: 48, 96>}, {pipeline_mode = #tpu.pipeline_mode<synchronous>, transform_indices = @transform_2, window_bounds = array<i64: 1, 96>}, {transform_indices = @transform_3, window_bounds = array<i64: 144, 96>}]} {
    %c0 = arith.constant 0 : index
    %c0_0 = arith.constant 0 : index
    %0 = vector.load %arg1[%c0, %c0_0] : memref<144x48xf32, #tpu.memory_space<vmem>>, vector<144x48xf32>
    %c0_1 = arith.constant 0 : index
    %c0_2 = arith.constant 0 : index
    %1 = vector.load %arg2[%c0_1, %c0_2] : memref<48x96xf32, #tpu.memory_space<vmem>>, vector<48x96xf32>
    %cst = arith.constant dense<0.000000e+00> : vector<144x96xf32>
    %2 = tpu.matmul %0, %1, %cst {dimension_numbers = #tpu.dot_dimension_numbers<[1], [0], [0], [1], [0, 0, 1, 1], [], []>} : vector<144x48xf32>, vector<48x96xf32>, vector<144x96xf32> -> vector<144x96xf32>
    %c0_3 = arith.constant 0 : index
    %c0_4 = arith.constant 0 : index
    %3 = vector.load %arg3[%c0_3, %c0_4] : memref<1x96xf32, #tpu.memory_space<vmem>>, vector<1x96xf32>
    %4 = vector.broadcast %3 : vector<1x96xf32> to vector<144x96xf32>
    %5 = arith.addf %2, %4 : vector<144x96xf32>
    %c0_5 = arith.constant 0 : index
    %c0_6 = arith.constant 0 : index
    %6 = vector.load %arg4[%c0_5, %c0_6] : memref<144x96xf32, #tpu.memory_space<vmem>>, vector<144x96xf32>
    tpu.vector_store %arg4[%c0_5, %c0_6], %5 {strides = array<i32>} : memref<144x96xf32, #tpu.memory_space<vmem>>, vector<144x96xf32>,
    return
  }
  func.func @transform_0(%arg0: i32) -> (i32, i32) {
    %c0_i32 = arith.constant 0 : i32
    %c0_i32_0 = arith.constant 0 : i32
    return %arg0, %c0_i32 : i32, i32
  }
  func.func @transform_1(%arg0: i32) -> (i32, i32) {
    %c0_i32 = arith.constant 0 : i32
    %c0_i32_0 = arith.constant 0 : i32
    %c0_i32_1 = arith.constant 0 : i32
    return %c0_i32, %c0_i32_0 : i32, i32
  }
  func.func @transform_2(%arg0: i32) -> (i32, i32) {
    %c0_i32 = arith.constant 0 : i32
    %c0_i32_0 = arith.constant 0 : i32
    %c0_i32_1 = arith.constant 0 : i32
    return %c0_i32, %c0_i32_0 : i32, i32
  }
  func.func @transform_3(%arg0: i32) -> (i32, i32) {
    %c0_i32 = arith.constant 0 : i32
    %c0_i32_0 = arith.constant 0 : i32
    return %arg0, %c0_i32 : i32, i32
  }
}

</mosaic_0001>

<llo_original>
// kernel: _forward_impl.7
$region0: #{_forward_impl.7}
  #allocation0 [shape = 'u32[]', space=smem, size = 0x4, offset = 0x4, fixed_abs, tag = 'smem constant byte address 0x4 - core index']
  #allocation1 [shape = 'u32[144,128]{1,0:T(1,128)}', space=vmem, size = 0x12000, scoped, tag = 'internal scratch']
  %s0 = inlined_call_operand.vmem [shape: f32[144,144], index: 0, kind: input, shape index: {}]
  %s1 = inlined_call_operand.vmem [shape: f32[144,288], index: 1, kind: input, shape index: {}]
  %s2 = inlined_call_operand.vmem [shape: f32[1,288], index: 2, kind: input, shape index: {}]
  %s3 = inlined_call_operand.vmem [shape: f32[144,288], index: 3, kind: output, shape index: {}]
  %s4 = sld [smem:[#allocation0]]
  $region22: #{_forward_impl.7} parent=0
    _
  %s6 = ssub.s32 1, %s4
  %s7 = scalar_select 0, %s6, %s4
  // Predicated region
  $region2: #{_forward_impl.7} parent=0 // pred_check
    _
  $region3: #{_forward_impl.7} parent=0 // pred_check_branch
    %9 = sbr.rel (0) target = $region5
  $region4: #{_forward_impl.7} parent=0 // pred_region
    _
  $region5: #{_forward_impl.7} parent=0 // pred_fallthru
    _
  // Predicated region
  $region6: #{_forward_impl.7} parent=0 // pred_check
    _
  $region7: #{_forward_impl.7} parent=0 // pred_check_branch
    %11 = sbr.rel (0) target = $region9
  $region8: #{_forward_impl.7} parent=0 // pred_region
    _
  $region9: #{_forward_impl.7} parent=0 // pred_fallthru
    _
  // Predicated region
  $region10: #{_forward_impl.7} parent=0 // pred_check
    _
  $region11: #{_forward_impl.7} parent=0 // pred_check_branch
    %13 = sbr.rel (0) target = $region13
  $region12: #{_forward_impl.7} parent=0 // pred_region
    _
  $region13: #{_forward_impl.7} parent=0 // pred_fallthru
    _
  %v14 = vld [vmem:[%s0] sm:$0xff]
  %v15 = vld [vmem:[%s0 + $0x8] sm:$0xff]
  %v16 = vld [vmem:[%s0 + $0x10] sm:$0xff]
  %v17 = vld [vmem:[%s0 + $0x18] sm:$0xff]
  %v18 = vld [vmem:[%s0 + $0x20] sm:$0xff]
  %v19 = vld [vmem:[%s0 + $0x28] sm:$0xff]
  %v20 = vld [vmem:[%s0 + $0x30] sm:$0xff]
  %v21 = vld [vmem:[%s0 + $0x38] sm:$0xff]
  %v22 = vld [vmem:[%s0 + $0x40] sm:$0xff]
  %v23 = vld [vmem:[%s0 + $0x48] sm:$0xff]
  %v24 = vld [vmem:[%s0 + $0x50] sm:$0xff]
  %v25 = vld [vmem:[%s0 + $0x58] sm:$0xff]
  %v26 = vld [vmem:[%s0 + $0x60] sm:$0xff]
  %v27 = vld [vmem:[%s0 + $0x68] sm:$0xff]
  %v28 = vld [vmem:[%s0 + $0x70] sm:$0xff]
  %v29 = vld [vmem:[%s0 + $0x78] sm:$0xff]
  %v30 = vld [vmem:[%s0 + $0x80] sm:$0xff]
  %v31 = vld [vmem:[%s0 + $0x88] sm:$0xff]
  %v32 = vld [vmem:[%s0 + $0x90] sm:$0xff]
  %v33 = vld [vmem:[%s0 + $0x98] sm:$0xff]
  %v34 = vld [vmem:[%s0 + $0xa0] sm:$0xff]
  %v35 = vld [vmem:[%s0 + $0xa8] sm:$0xff]
  %v36 = vld [vmem:[%s0 + $0xb0] sm:$0xff]
  %v37 = vld [vmem:[%s0 + $0xb8] sm:$0xff]
  %v38 = vld [vmem:[%s0 + $0xc0] sm:$0xff]
  %v39 = vld [vmem:[%s0 + $0xc8] sm:$0xff]
  %v40 = vld [vmem:[%s0 + $0xd0] sm:$0xff]
  %v41 = vld [vmem:[%s0 + $0xd8] sm:$0xff]
  %v42 = vld [vmem:[%s0 + $0xe0] sm:$0xff]
  %v43 = vld [vmem:[%s0 + $0xe8] sm:$0xff]
  %v44 = vld [vmem:[%s0 + $0xf0] sm:$0xff]
  %v45 = vld [vmem:[%s0 + $0xf8] sm:$0xff]
  %v46 = vld [vmem:[%s0 + $0x100] sm:$0xff]
  %v47 = vld [vmem:[%s0 + $0x108] sm:$0xff]
  %v48 = vld [vmem:[%s0 + $0x110] sm:$0xff]
  %v49 = vld [vmem:[%s0 + $0x118] sm:$0xff]
  %v50 = vld [vmem:[%s1] sm:$0xff]
  %v51 = vld [vmem:[%s1 + $0x8] sm:$0xff]
  %v52 = vld [vmem:[%s1 + $0x10] sm:$0xff]
  %v53 = vld [vmem:[%s1 + $0x18] sm:$0xff]
  %v54 = vld [vmem:[%s1 + $0x20] sm:$0xff]
  %v55 = vld [vmem:[%s1 + $0x28] sm:$0xff]
  %v56 = vld [vmem:[%s1 + $0x30] sm:$0xff]
  %v57 = vld [vmem:[%s1 + $0x38] sm:$0xff]
  %v58 = vld [vmem:[%s1 + $0x40] sm:$0xff]
  %v59 = vld [vmem:[%s1 + $0x48] sm:$0xff]
  %v60 = vld [vmem:[%s1 + $0x50] sm:$0xff]
  %v61 = vld [vmem:[%s1 + $0x58] sm:$0xff]
  %v62 = vld [vmem:[%s1 + $0x60] sm:$0xff]
  %v63 = vld [vmem:[%s1 + $0x68] sm:$0xff]
  %v64 = vld [vmem:[%s1 + $0x70] sm:$0xff]
  %v65 = vld [vmem:[%s1 + $0x78] sm:$0xff]
  %v66 = vld [vmem:[%s1 + $0x80] sm:$0xff]
  %v67 = vld [vmem:[%s1 + $0x88] sm:$0xff]
  %v68 = vld [vmem:[%s1 + $0x90] sm:$0xff]
  %v69 = vld [vmem:[%s1 + $0x98] sm:$0xff]
  %v70 = vld [vmem:[%s1 + $0xa0] sm:$0xff]
  %v71 = vld [vmem:[%s1 + $0xa8] sm:$0xff]
  %v72 = vld [vmem:[%s1 + $0xb0] sm:$0xff]
  %v73 = vld [vmem:[%s1 + $0xb8] sm:$0xff]
  %v74 = vld [vmem:[%s1 + $0xc0] sm:$0xff]
  %v75 = vld [vmem:[%s1 + $0xc8] sm:$0xff]
  %v76 = vld [vmem:[%s1 + $0xd0] sm:$0xff]
  %v77 = vld [vmem:[%s1 + $0xd8] sm:$0xff]
  %v78 = vld [vmem:[%s1 + $0xe0] sm:$0xff]
  %v79 = vld [vmem:[%s1 + $0xe8] sm:$0xff]
  %v80 = vld [vmem:[%s1 + $0xf0] sm:$0xff]
  %v81 = vld [vmem:[%s1 + $0xf8] sm:$0xff]
  %v82 = vld [vmem:[%s1 + $0x100] sm:$0xff]
  %v83 = vld [vmem:[%s1 + $0x108] sm:$0xff]
  %v84 = vld [vmem:[%s1 + $0x110] sm:$0xff]
  %v85 = vld [vmem:[%s1 + $0x118] sm:$0xff]
  %v86 = vld [vmem:[%s1 + $0x120] sm:$0xff]
  %v87 = vld [vmem:[%s1 + $0x128] sm:$0xff]
  %v88 = vld [vmem:[%s1 + $0x130] sm:$0xff]
  %v89 = vld [vmem:[%s1 + $0x138] sm:$0xff]
  %v90 = vld [vmem:[%s1 + $0x140] sm:$0xff]
  %v91 = vld [vmem:[%s1 + $0x148] sm:$0xff]
  %v92 = vld [vmem:[%s1 + $0x150] sm:$0xff]
  %v93 = vld [vmem:[%s1 + $0x158] sm:$0xff]
  %v94 = vld [vmem:[%s1 + $0x160] sm:$0xff]
  %v95 = vld [vmem:[%s1 + $0x168] sm:$0xff]
  %v96 = vld [vmem:[%s1 + $0x170] sm:$0xff]
  %v97 = vld [vmem:[%s1 + $0x178] sm:$0xff]
  %v98 = vld [vmem:[%s1 + $0x180] sm:$0xff]
  %v99 = vld [vmem:[%s1 + $0x188] sm:$0xff]
  %v100 = vld [vmem:[%s1 + $0x190] sm:$0xff]
  %v101 = vld [vmem:[%s1 + $0x198] sm:$0xff]
  %v102 = vld [vmem:[%s1 + $0x1a0] sm:$0xff]
  %v103 = vld [vmem:[%s1 + $0x1a8] sm:$0xff]
  %v104 = vld [vmem:[%s2] sm:$0x7]
  %v106 = vlaneseq
  %v107 = vshrl.u32 %v106, 7
  %v108 = vsub.s32 0, %v107
  %v109 = vrot.slane %v104, %v108
  %v110 = vlaneseq
  %v111 = vshrl.u32 %v110, 7
  %v112 = vsub.s32 1, %v111
  %v113 = vrot.slane %v104, %v112
  %v114 = vlaneseq
  %v115 = vshrl.u32 %v114, 7
  %v116 = vsub.s32 2, %v115
  %v117 = vrot.slane %v104, %v116
  %vm121 = vcmask 130048
  %v123 = vsel %vm121, %v15, 0
  %v126 = vsel %vm121, %v17, 0
  %v129 = vsel %vm121, %v19, 0
  %v132 = vsel %vm121, %v21, 0
  %v135 = vsel %vm121, %v23, 0
  %v138 = vsel %vm121, %v25, 0
  %v141 = vsel %vm121, %v27, 0
  %v144 = vsel %vm121, %v29, 0
  %v147 = vsel %vm121, %v31, 0
  %v150 = vsel %vm121, %v33, 0
  %v153 = vsel %vm121, %v35, 0
  %v156 = vsel %vm121, %v37, 0
  %v159 = vsel %vm121, %v39, 0
  %v162 = vsel %vm121, %v41, 0
  %v165 = vsel %vm121, %v43, 0
  %v168 = vsel %vm121, %v45, 0
  %v171 = vsel %vm121, %v47, 0
  %v174 = vsel %vm121, %v49, 0
  %176 = vmatprep.subr.mxu0 %v51
  %177 = vmatpush1.msra.mxu0 %v50
  %178 = vmatprep.subr.mxu0 %v54
  %179 = vmatpush1.msra.mxu0 %v53
  %180 = vmatprep.subr.mxu0 %v57
  %181 = vmatpush1.msra.mxu0 %v56
  %182 = vmatprep.subr.mxu0 %v60
  %183 = vmatpush1.msra.mxu0 %v59
  %184 = vmatprep.subr.mxu0 %v63
  %185 = vmatpush1.msra.mxu0 %v62
  %186 = vmatprep.subr.mxu0 %v66
  %187 = vmatpush1.msra.mxu0 %v65
  %188 = vmatprep.subr.mxu0 %v69
  %189 = vmatpush1.msra.mxu0 %v68
  %190 = vmatprep.subr.mxu0 %v72
  %191 = vmatpush1.msra.mxu0 %v71
  %192 = vmatprep.subr.mxu0 %v75
  %193 = vmatpush1.msra.mxu0 %v74
  %194 = vmatprep.subr.mxu0 %v78
  %195 = vmatpush1.msra.mxu0 %v77
  %196 = vmatprep.subr.mxu0 %v81
  %197 = vmatpush1.msra.mxu0 %v80
  %198 = vmatprep.subr.mxu0 %v84
  %199 = vmatpush1.msra.mxu0 %v83
  %200 = vmatprep.subr.mxu0 %v87
  %201 = vmatpush1.msra.mxu0 %v86
  %202 = vmatprep.subr.mxu0 %v90
  %203 = vmatpush1.msra.mxu0 %v89
  %204 = vmatprep.subr.mxu0 %v93
  %205 = vmatpush1.msra.mxu0 %v92
  %206 = vmatprep.subr.mxu0 %v96
  %207 = vmatpush1.msra.mxu0 %v95
  %208 = vmatprep.subr.mxu0 %v99
  %209 = vmatpush1.msra.mxu0 %v98
  %210 = vmatprep.subr.mxu0 %v102
  %211 = vmatpush1.msra.mxu0 %v101
  %212 = vmatprep.subr.mxu0 0.0
  %213 = vmatpush1.msra.mxu0 0.0
  %214 = vmatprep.subr.mxu0 0.0
  %215 = vmatpush1.msra.mxu0 0.0
  %216 = vmatprep.subr.mxu0 0.0
  %217 = vmatpush1.msra.mxu0 0.0
  %218 = vmatprep.subr.mxu0 0.0
  %219 = vmatpush1.msra.mxu0 0.0
  %220 = vmatprep.subr.mxu0 0.0
  %221 = vmatpush1.msra.mxu0 0.0
  %222 = vmatprep.subr.mxu0 0.0
  %223 = vmatpush1.msra.mxu0 0.0
  %224 = vmatprep.subr.mxu0 0.0
  %225 = vmatpush1.msra.mxu0 0.0
  %226 = vmatprep.subr.mxu0 0.0
  %227 = vmatpush1.msra.mxu0 0.0
  %228 = vmatprep.subr.mxu0 0.0
  %229 = vmatpush1.msra.mxu0 0.0
  %230 = vmatprep.subr.mxu0 0.0
  %231 = vmatpush1.msra.mxu0 0.0
  %232 = vmatprep.subr.mxu0 0.0
  %233 = vmatpush1.msra.mxu0 0.0
  %234 = vmatprep.subr.mxu0 0.0
  %235 = vmatpush1.msra.mxu0 0.0
  %236 = vmatprep.subr.mxu0 0.0
  %237 = vmatpush1.msra.mxu0 0.0
  %238 = vmatprep.subr.mxu0 0.0
  %239 = vmatpush1.msra.mxu0 0.0
  %240 = vmatprep.mubr.f32.mxu0 %v123
  %241 = vmatmul.mubr.f32.gmra.mrb[0].mxu0 %v14
  %v242 = vpop.f32.mrb[0].mxu0
  %v243 = vadd.f32 %v109, %v242
  %v244 = vpop.f32.mrb[0].mxu0
  %v245 = vadd.f32 %v113, %v244
  %246 = vmatprep.mubr.f32.mxu0 %v126
  %247 = vmatmul.mubr.f32.gmra.mrb[0].mxu0 %v16
  %v248 = vpop.f32.mrb[0].mxu0
  %v249 = vadd.f32 %v109, %v248
  %v250 = vpop.f32.mrb[0].mxu0
  %v251 = vadd.f32 %v113, %v250
  %252 = vmatprep.mubr.f32.mxu0 %v129
  %253 = vmatmul.mubr.f32.gmra.mrb[0].mxu0 %v18
  %v254 = vpop.f32.mrb[0].mxu0
  %v255 = vadd.f32 %v109, %v254
  %v256 = vpop.f32.mrb[0].mxu0
  %v257 = vadd.f32 %v113, %v256
  %258 = vmatprep.mubr.f32.mxu0 %v132
  %259 = vmatmul.mubr.f32.gmra.mrb[0].mxu0 %v20
  %v260 = vpop.f32.mrb[0].mxu0
  %v261 = vadd.f32 %v109, %v260
  %v262 = vpop.f32.mrb[0].mxu0
  %v263 = vadd.f32 %v113, %v262
  %264 = vmatprep.mubr.f32.mxu0 %v135
  %265 = vmatmul.mubr.f32.gmra.mrb[0].mxu0 %v22
  %v266 = vpop.f32.mrb[0].mxu0
  %v267 = vadd.f32 %v109, %v266
  %v268 = vpop.f32.mrb[0].mxu0
  %v269 = vadd.f32 %v113, %v268
  %270 = vmatprep.mubr.f32.mxu0 %v138
  %271 = vmatmul.mubr.f32.gmra.mrb[0].mxu0 %v24
  %v272 = vpop.f32.mrb[0].mxu0
  %v273 = vadd.f32 %v109, %v272
  %v274 = vpop.f32.mrb[0].mxu0
  %v275 = vadd.f32 %v113, %v274
  %276 = vmatprep.mubr.f32.mxu0 %v141
  %277 = vmatmul.mubr.f32.gmra.mrb[0].mxu0 %v26
  %v278 = vpop.f32.mrb[0].mxu0
  %v279 = vadd.f32 %v109, %v278
  %v280 = vpop.f32.mrb[0].mxu0
  %v281 = vadd.f32 %v113, %v280
  %282 = vmatprep.mubr.f32.mxu0 %v144
  %283 = vmatmul.mubr.f32.gmra.mrb[0].mxu0 %v28
  %v284 = vpop.f32.mrb[0].mxu0
  %v285 = vadd.f32 %v109, %v284
  %v286 = vpop.f32.mrb[0].mxu0
  %v287 = vadd.f32 %v113, %v286
  %288 = vmatprep.mubr.f32.mxu0 %v147
  %289 = vmatmul.mubr.f32.gmra.mrb[0].mxu0 %v30
  %v290 = vpop.f32.mrb[0].mxu0
  %v291 = vadd.f32 %v109, %v290
  %v292 = vpop.f32.mrb[0].mxu0
  %v293 = vadd.f32 %v113, %v292
  %294 = vmatprep.mubr.f32.mxu0 %v150
  %295 = vmatmul.mubr.f32.gmra.mrb[0].mxu0 %v32
  %v296 = vpop.f32.mrb[0].mxu0
  %v297 = vadd.f32 %v109, %v296
  %v298 = vpop.f32.mrb[0].mxu0
  %v299 = vadd.f32 %v113, %v298
  %300 = vmatprep.mubr.f32.mxu0 %v153
  %301 = vmatmul.mubr.f32.gmra.mrb[0].mxu0 %v34
  %v302 = vpop.f32.mrb[0].mxu0
  %v303 = vadd.f32 %v109, %v302
  %v304 = vpop.f32.mrb[0].mxu0
  %v305 = vadd.f32 %v113, %v304
  %306 = vmatprep.mubr.f32.mxu0 %v156
  %307 = vmatmul.mubr.f32.gmra.mrb[0].mxu0 %v36
  %v308 = vpop.f32.mrb[0].mxu0
  %v309 = vadd.f32 %v109, %v308
  %v310 = vpop.f32.mrb[0].mxu0
  %v311 = vadd.f32 %v113, %v310
  %312 = vmatprep.mubr.f32.mxu0 %v159
  %313 = vmatmul.mubr.f32.gmra.mrb[0].mxu0 %v38
  %v314 = vpop.f32.mrb[0].mxu0
  %v315 = vadd.f32 %v109, %v314
  %v316 = vpop.f32.mrb[0].mxu0
  %v317 = vadd.f32 %v113, %v316
  %318 = vmatprep.mubr.f32.mxu0 %v162
  %319 = vmatmul.mubr.f32.gmra.mrb[0].mxu0 %v40
  %v320 = vpop.f32.mrb[0].mxu0
  %v321 = vadd.f32 %v109, %v320
  %v322 = vpop.f32.mrb[0].mxu0
  %v323 = vadd.f32 %v113, %v322
  %324 = vmatprep.mubr.f32.mxu0 %v165
  %325 = vmatmul.mubr.f32.gmra.mrb[0].mxu0 %v42
  %v326 = vpop.f32.mrb[0].mxu0
  %v327 = vadd.f32 %v109, %v326
  %v328 = vpop.f32.mrb[0].mxu0
  %v329 = vadd.f32 %v113, %v328
  %330 = vmatprep.mubr.f32.mxu0 %v168
  %331 = vmatmul.mubr.f32.gmra.mrb[0].mxu0 %v44
  %v332 = vpop.f32.mrb[0].mxu0
  %v333 = vadd.f32 %v109, %v332
  %v334 = vpop.f32.mrb[0].mxu0
  %v335 = vadd.f32 %v113, %v334
  %336 = vmatprep.mubr.f32.mxu0 %v171
  %337 = vmatmul.mubr.f32.gmra.mrb[0].mxu0 %v46
  %v338 = vpop.f32.mrb[0].mxu0
  %v339 = vadd.f32 %v109, %v338
  %v340 = vpop.f32.mrb[0].mxu0
  %v341 = vadd.f32 %v113, %v340
  %342 = vmatprep.mubr.f32.mxu0 %v174
  %343 = vmatmul.mubr.f32.gmra.mrb[0].mxu0 %v48
  %v344 = vpop.f32.mrb[0].mxu0
  %v345 = vadd.f32 %v109, %v344
  %v346 = vpop.f32.mrb[0].mxu0
  %v347 = vadd.f32 %v113, %v346
  %348 = vdwg.mxu0
  %349 = vmatprep.subr.mxu0 0.0
  %350 = vmatpush1.msra.mxu0 %v52
  %351 = vmatprep.subr.mxu0 0.0
  %352 = vmatpush1.msra.mxu0 %v55
  %353 = vmatprep.subr.mxu0 0.0
  %354 = vmatpush1.msra.mxu0 %v58
  %355 = vmatprep.subr.mxu0 0.0
  %356 = vmatpush1.msra.mxu0 %v61
  %357 = vmatprep.subr.mxu0 0.0
  %358 = vmatpush1.msra.mxu0 %v64
  %359 = vmatprep.subr.mxu0 0.0
  %360 = vmatpush1.msra.mxu0 %v67
  %361 = vmatprep.subr.mxu0 0.0
  %362 = vmatpush1.msra.mxu0 %v70
  %363 = vmatprep.subr.mxu0 0.0
  %364 = vmatpush1.msra.mxu0 %v73
  %365 = vmatprep.subr.mxu0 0.0
  %366 = vmatpush1.msra.mxu0 %v76
  %367 = vmatprep.subr.mxu0 0.0
  %368 = vmatpush1.msra.mxu0 %v79
  %369 = vmatprep.subr.mxu0 0.0
  %370 = vmatpush1.msra.mxu0 %v82
  %371 = vmatprep.subr.mxu0 0.0
  %372 = vmatpush1.msra.mxu0 %v85
  %373 = vmatprep.subr.mxu0 0.0
  %374 = vmatpush1.msra.mxu0 %v88
  %375 = vmatprep.subr.mxu0 0.0
  %376 = vmatpush1.msra.mxu0 %v91
  %377 = vmatprep.subr.mxu0 0.0
  %378 = vmatpush1.msra.mxu0 %v94
  %379 = vmatprep.subr.mxu0 0.0
  %380 = vmatpush1.msra.mxu0 %v97
  %381 = vmatprep.subr.mxu0 0.0
  %382 = vmatpush1.msra.mxu0 %v100
  %383 = vmatprep.subr.mxu0 0.0
  %384 = vmatpush1.msra.mxu0 %v103
  %385 = vmatprep.subr.mxu0 0.0
  %386 = vmatpush1.msra.mxu0 0.0
  %387 = vmatprep.subr.mxu0 0.0
  %388 = vmatpush1.msra.mxu0 0.0
  %389 = vmatprep.subr.mxu0 0.0
  %390 = vmatpush1.msra.mxu0 0.0
  %391 = vmatprep.subr.mxu0 0.0
  %392 = vmatpush1.msra.mxu0 0.0
  %393 = vmatprep.subr.mxu0 0.0
  %394 = vmatpush1.msra.mxu0 0.0
  %395 = vmatprep.subr.mxu0 0.0
  %396 = vmatpush1.msra.mxu0 0.0
  %397 = vmatprep.subr.mxu0 0.0
  %398 = vmatpush1.msra.mxu0 0.0
  %399 = vmatprep.subr.mxu0 0.0
  %400 = vmatpush1.msra.mxu0 0.0
  %401 = vmatprep.subr.mxu0 0.0
  %402 = vmatpush1.msra.mxu0 0.0
  %403 = vmatprep.subr.mxu0 0.0
  %404 = vmatpush1.msra.mxu0 0.0
  %405 = vmatprep.subr.mxu0 0.0
  %406 = vmatpush1.msra.mxu0 0.0
  %407 = vmatprep.subr.mxu0 0.0
  %408 = vmatpush1.msra.mxu0 0.0
  %409 = vmatprep.subr.mxu0 0.0
  %410 = vmatpush1.msra.mxu0 0.0
  %411 = vmatprep.subr.mxu0 0.0
  %412 = vmatpush1.msra.mxu0 0.0
  %413 = vmatprep.mubr.f32.mxu0 %v123
  %414 = vmatmul.mubr.f32.gmra.mrb[0].mxu0 %v14
  %v415 = vpop.f32.mrb[0].mxu0
  %v416 = vadd.f32 %v117, %v415
  %v417 = vpop.f32.mrb[0].mxu0
  %418 = vmatprep.mubr.f32.mxu0 %v126
  %419 = vmatmul.mubr.f32.gmra.mrb[0].mxu0 %v16
  %v420 = vpop.f32.mrb[0].mxu0
  %v421 = vadd.f32 %v117, %v420
  %v422 = vpop.f32.mrb[0].mxu0
  %423 = vmatprep.mubr.f32.mxu0 %v129
  %424 = vmatmul.mubr.f32.gmra.mrb[0].mxu0 %v18
  %v425 = vpop.f32.mrb[0].mxu0
  %v426 = vadd.f32 %v117, %v425
  %v427 = vpop.f32.mrb[0].mxu0
  %428 = vmatprep.mubr.f32.mxu0 %v132
  %429 = vmatmul.mubr.f32.gmra.mrb[0].mxu0 %v20
  %v430 = vpop.f32.mrb[0].mxu0
  %v431 = vadd.f32 %v117, %v430
  %v432 = vpop.f32.mrb[0].mxu0
  %433 = vmatprep.mubr.f32.mxu0 %v135
  %434 = vmatmul.mubr.f32.gmra.mrb[0].mxu0 %v22
  %v435 = vpop.f32.mrb[0].mxu0
  %v436 = vadd.f32 %v117, %v435
  %v437 = vpop.f32.mrb[0].mxu0
  %438 = vmatprep.mubr.f32.mxu0 %v138
  %439 = vmatmul.mubr.f32.gmra.mrb[0].mxu0 %v24
  %v440 = vpop.f32.mrb[0].mxu0
  %v441 = vadd.f32 %v117, %v440
  %v442 = vpop.f32.mrb[0].mxu0
  %443 = vmatprep.mubr.f32.mxu0 %v141
  %444 = vmatmul.mubr.f32.gmra.mrb[0].mxu0 %v26
  %v445 = vpop.f32.mrb[0].mxu0
  %v446 = vadd.f32 %v117, %v445
  %v447 = vpop.f32.mrb[0].mxu0
  %448 = vmatprep.mubr.f32.mxu0 %v144
  %449 = vmatmul.mubr.f32.gmra.mrb[0].mxu0 %v28
  %v450 = vpop.f32.mrb[0].mxu0
  %v451 = vadd.f32 %v117, %v450
  %v452 = vpop.f32.mrb[0].mxu0
  %453 = vmatprep.mubr.f32.mxu0 %v147
  %454 = vmatmul.mubr.f32.gmra.mrb[0].mxu0 %v30
  %v455 = vpop.f32.mrb[0].mxu0
  %v456 = vadd.f32 %v117, %v455
  %v457 = vpop.f32.mrb[0].mxu0
  %458 = vmatprep.mubr.f32.mxu0 %v150
  %459 = vmatmul.mubr.f32.gmra.mrb[0].mxu0 %v32
  %v460 = vpop.f32.mrb[0].mxu0
  %v461 = vadd.f32 %v117, %v460
  %v462 = vpop.f32.mrb[0].mxu0
  %463 = vmatprep.mubr.f32.mxu0 %v153
  %464 = vmatmul.mubr.f32.gmra.mrb[0].mxu0 %v34
  %v465 = vpop.f32.mrb[0].mxu0
  %v466 = vadd.f32 %v117, %v465
  %v467 = vpop.f32.mrb[0].mxu0
  %468 = vmatprep.mubr.f32.mxu0 %v156
  %469 = vmatmul.mubr.f32.gmra.mrb[0].mxu0 %v36
  %v470 = vpop.f32.mrb[0].mxu0
  %v471 = vadd.f32 %v117, %v470
  %v472 = vpop.f32.mrb[0].mxu0
  %473 = vmatprep.mubr.f32.mxu0 %v159
  %474 = vmatmul.mubr.f32.gmra.mrb[0].mxu0 %v38
  %v475 = vpop.f32.mrb[0].mxu0
  %v476 = vadd.f32 %v117, %v475
  %v477 = vpop.f32.mrb[0].mxu0
  %478 = vmatprep.mubr.f32.mxu0 %v162
  %479 = vmatmul.mubr.f32.gmra.mrb[0].mxu0 %v40
  %v480 = vpop.f32.mrb[0].mxu0
  %v481 = vadd.f32 %v117, %v480
  %v482 = vpop.f32.mrb[0].mxu0
  %483 = vmatprep.mubr.f32.mxu0 %v165
  %484 = vmatmul.mubr.f32.gmra.mrb[0].mxu0 %v42
  %v485 = vpop.f32.mrb[0].mxu0
  %v486 = vadd.f32 %v117, %v485
  %v487 = vpop.f32.mrb[0].mxu0
  %488 = vmatprep.mubr.f32.mxu0 %v168
  %489 = vmatmul.mubr.f32.gmra.mrb[0].mxu0 %v44
  %v490 = vpop.f32.mrb[0].mxu0
  %v491 = vadd.f32 %v117, %v490
  %v492 = vpop.f32.mrb[0].mxu0
  %493 = vmatprep.mubr.f32.mxu0 %v171
  %494 = vmatmul.mubr.f32.gmra.mrb[0].mxu0 %v46
  %v495 = vpop.f32.mrb[0].mxu0
  %v496 = vadd.f32 %v117, %v495
  %v497 = vpop.f32.mrb[0].mxu0
  %498 = vmatprep.mubr.f32.mxu0 %v174
  %499 = vmatmul.mubr.f32.gmra.mrb[0].mxu0 %v48
  %v500 = vpop.f32.mrb[0].mxu0
  %v501 = vadd.f32 %v117, %v500
  %v502 = vpop.f32.mrb[0].mxu0
  %503 = vdwg.mxu0
  %504 = vst [vmem:[%s3] sm:$0xff] %v243
  %505 = vst [vmem:[%s3 + $0x8] sm:$0xff] %v245
  %vm506 = vcmask 261120
  %507 = vst.msk [vmem:[%s3 + $0x10] sm:$0xff] %vm506, %v416
  %508 = vst [vmem:[%s3 + $0x18] sm:$0xff] %v249
  %509 = vst [vmem:[%s3 + $0x20] sm:$0xff] %v251
  %510 = vst.msk [vmem:[%s3 + $0x28] sm:$0xff] %vm506, %v421
  %511 = vst [vmem:[%s3 + $0x30] sm:$0xff] %v255
  %512 = vst [vmem:[%s3 + $0x38] sm:$0xff] %v257
  %513 = vst.msk [vmem:[%s3 + $0x40] sm:$0xff] %vm506, %v426
  %514 = vst [vmem:[%s3 + $0x48] sm:$0xff] %v261
  %515 = vst [vmem:[%s3 + $0x50] sm:$0xff] %v263
  %516 = vst.msk [vmem:[%s3 + $0x58] sm:$0xff] %vm506, %v431
  %517 = vst [vmem:[%s3 + $0x60] sm:$0xff] %v267
  %518 = vst [vmem:[%s3 + $0x68] sm:$0xff] %v269
  %519 = vst.msk [vmem:[%s3 + $0x70] sm:$0xff] %vm506, %v436
  %520 = vst [vmem:[%s3 + $0x78] sm:$0xff] %v273
  %521 = vst [vmem:[%s3 + $0x80] sm:$0xff] %v275
  %522 = vst.msk [vmem:[%s3 + $0x88] sm:$0xff] %vm506, %v441
  %523 = vst [vmem:[%s3 + $0x90] sm:$0xff] %v279
  %524 = vst [vmem:[%s3 + $0x98] sm:$0xff] %v281
  %525 = vst.msk [vmem:[%s3 + $0xa0] sm:$0xff] %vm506, %v446
  %526 = vst [vmem:[%s3 + $0xa8] sm:$0xff] %v285
  %527 = vst [vmem:[%s3 + $0xb0] sm:$0xff] %v287
  %528 = vst.msk [vmem:[%s3 + $0xb8] sm:$0xff] %vm506, %v451
  %529 = vst [vmem:[%s3 + $0xc0] sm:$0xff] %v291
  %530 = vst [vmem:[%s3 + $0xc8] sm:$0xff] %v293
  %531 = vst.msk [vmem:[%s3 + $0xd0] sm:$0xff] %vm506, %v456
  %532 = vst [vmem:[%s3 + $0xd8] sm:$0xff] %v297
  %533 = vst [vmem:[%s3 + $0xe0] sm:$0xff] %v299
  %534 = vst.msk [vmem:[%s3 + $0xe8] sm:$0xff] %vm506, %v461
  %535 = vst [vmem:[%s3 + $0xf0] sm:$0xff] %v303
  %536 = vst [vmem:[%s3 + $0xf8] sm:$0xff] %v305
  %537 = vst.msk [vmem:[%s3 + $0x100] sm:$0xff] %vm506, %v466
  %538 = vst [vmem:[%s3 + $0x108] sm:$0xff] %v309
  %539 = vst [vmem:[%s3 + $0x110] sm:$0xff] %v311
  %540 = vst.msk [vmem:[%s3 + $0x118] sm:$0xff] %vm506, %v471
  %541 = vst [vmem:[%s3 + $0x120] sm:$0xff] %v315
  %542 = vst [vmem:[%s3 + $0x128] sm:$0xff] %v317
  %543 = vst.msk [vmem:[%s3 + $0x130] sm:$0xff] %vm506, %v476
  %544 = vst [vmem:[%s3 + $0x138] sm:$0xff] %v321
  %545 = vst [vmem:[%s3 + $0x140] sm:$0xff] %v323
  %546 = vst.msk [vmem:[%s3 + $0x148] sm:$0xff] %vm506, %v481
  %547 = vst [vmem:[%s3 + $0x150] sm:$0xff] %v327
  %548 = vst [vmem:[%s3 + $0x158] sm:$0xff] %v329
  %549 = vst.msk [vmem:[%s3 + $0x160] sm:$0xff] %vm506, %v486
  %550 = vst [vmem:[%s3 + $0x168] sm:$0xff] %v333
  %551 = vst [vmem:[%s3 + $0x170] sm:$0xff] %v335
  %552 = vst.msk [vmem:[%s3 + $0x178] sm:$0xff] %vm506, %v491
  %553 = vst [vmem:[%s3 + $0x180] sm:$0xff] %v339
  %554 = vst [vmem:[%s3 + $0x188] sm:$0xff] %v341
  %555 = vst.msk [vmem:[%s3 + $0x190] sm:$0xff] %vm506, %v496
  %556 = vst [vmem:[%s3 + $0x198] sm:$0xff] %v345
  %557 = vst [vmem:[%s3 + $0x1a0] sm:$0xff] %v347
  %558 = vst.msk [vmem:[%s3 + $0x1a8] sm:$0xff] %vm506, %v501
  // Predicated region
  $region14: #{_forward_impl.7} parent=0 // pred_check
    _
  $region15: #{_forward_impl.7} parent=0 // pred_check_branch
    %560 = sbr.rel (0) target = $region17
  $region16: #{_forward_impl.7} parent=0 // pred_region
    _
  $region17: #{_forward_impl.7} parent=0 // pred_fallthru
    _
  // Predicated region
  $region18: #{_forward_impl.7} parent=0 // pred_check
    _
  $region19: #{_forward_impl.7} parent=0 // pred_check_branch
    %562 = sbr.rel (0) target = $region21
  $region20: #{_forward_impl.7} parent=0 // pred_region
    _
  $region21: #{_forward_impl.7} parent=0 // pred_fallthru
    _

// kernel: _forward_impl.9
$region0: #{_forward_impl.9}
  #allocation0 [shape = 'u32[]', space=smem, size = 0x4, offset = 0x4, fixed_abs, tag = 'smem constant byte address 0x4 - core index']
  #allocation1 [shape = 'u32[144,128]{1,0:T(1,128)}', space=vmem, size = 0x12000, scoped, tag = 'internal scratch']
  %s0 = inlined_call_operand.vmem [shape: f32[144,144], index: 0, kind: input, shape index: {}]
  %s1 = inlined_call_operand.vmem [shape: f32[144,96], index: 1, kind: input, shape index: {}]
  %s2 = inlined_call_operand.vmem [shape: f32[1,96], index: 2, kind: input, shape index: {}]
  %s3 = inlined_call_operand.vmem [shape: f32[144,96], index: 3, kind: output, shape index: {}]
  %s4 = sld [smem:[#allocation0]]
  $region22: #{_forward_impl.9} parent=0
    _
  %s6 = ssub.s32 1, %s4
  %s7 = scalar_select 0, %s6, %s4
  // Predicated region
  $region2: #{_forward_impl.9} parent=0 // pred_check
    _
  $region3: #{_forward_impl.9} parent=0 // pred_check_branch
    %9 = sbr.rel (0) target = $region5
  $region4: #{_forward_impl.9} parent=0 // pred_region
    _
  $region5: #{_forward_impl.9} parent=0 // pred_fallthru
    _
  // Predicated region
  $region6: #{_forward_impl.9} parent=0 // pred_check
    _
  $region7: #{_forward_impl.9} parent=0 // pred_check_branch
    %11 = sbr.rel (0) target = $region9
  $region8: #{_forward_impl.9} parent=0 // pred_region
    _
  $region9: #{_forward_impl.9} parent=0 // pred_fallthru
    _
  // Predicated region
  $region10: #{_forward_impl.9} parent=0 // pred_check
    _
  $region11: #{_forward_impl.9} parent=0 // pred_check_branch
    %13 = sbr.rel (0) target = $region13
  $region12: #{_forward_impl.9} parent=0 // pred_region
    _
  $region13: #{_forward_impl.9} parent=0 // pred_fallthru
    _
  %v14 = vld [vmem:[%s0] sm:$0xff]
  %v15 = vld [vmem:[%s0 + $0x8] sm:$0xff]
  %v16 = vld [vmem:[%s0 + $0x10] sm:$0xff]
  %v17 = vld [vmem:[%s0 + $0x18] sm:$0xff]
  %v18 = vld [vmem:[%s0 + $0x20] sm:$0xff]
  %v19 = vld [vmem:[%s0 + $0x28] sm:$0xff]
  %v20 = vld [vmem:[%s0 + $0x30] sm:$0xff]
  %v21 = vld [vmem:[%s0 + $0x38] sm:$0xff]
  %v22 = vld [vmem:[%s0 + $0x40] sm:$0xff]
  %v23 = vld [vmem:[%s0 + $0x48] sm:$0xff]
  %v24 = vld [vmem:[%s0 + $0x50] sm:$0xff]
  %v25 = vld [vmem:[%s0 + $0x58] sm:$0xff]
  %v26 = vld [vmem:[%s0 + $0x60] sm:$0xff]
  %v27 = vld [vmem:[%s0 + $0x68] sm:$0xff]
  %v28 = vld [vmem:[%s0 + $0x70] sm:$0xff]
  %v29 = vld [vmem:[%s0 + $0x78] sm:$0xff]
  %v30 = vld [vmem:[%s0 + $0x80] sm:$0xff]
  %v31 = vld [vmem:[%s0 + $0x88] sm:$0xff]
  %v32 = vld [vmem:[%s0 + $0x90] sm:$0xff]
  %v33 = vld [vmem:[%s0 + $0x98] sm:$0xff]
  %v34 = vld [vmem:[%s0 + $0xa0] sm:$0xff]
  %v35 = vld [vmem:[%s0 + $0xa8] sm:$0xff]
  %v36 = vld [vmem:[%s0 + $0xb0] sm:$0xff]
  %v37 = vld [vmem:[%s0 + $0xb8] sm:$0xff]
  %v38 = vld [vmem:[%s0 + $0xc0] sm:$0xff]
  %v39 = vld [vmem:[%s0 + $0xc8] sm:$0xff]
  %v40 = vld [vmem:[%s0 + $0xd0] sm:$0xff]
  %v41 = vld [vmem:[%s0 + $0xd8] sm:$0xff]
  %v42 = vld [vmem:[%s0 + $0xe0] sm:$0xff]
  %v43 = vld [vmem:[%s0 + $0xe8] sm:$0xff]
  %v44 = vld [vmem:[%s0 + $0xf0] sm:$0xff]
  %v45 = vld [vmem:[%s0 + $0xf8] sm:$0xff]
  %v46 = vld [vmem:[%s0 + $0x100] sm:$0xff]
  %v47 = vld [vmem:[%s0 + $0x108] sm:$0xff]
  %v48 = vld [vmem:[%s0 + $0x110] sm:$0xff]
  %v49 = vld [vmem:[%s0 + $0x118] sm:$0xff]
  %v50 = vld [vmem:[%s1] sm:$0xff]
  %v51 = vld [vmem:[%s1 + $0x8] sm:$0xff]
  %v52 = vld [vmem:[%s1 + $0x10] sm:$0xff]
  %v53 = vld [vmem:[%s1 + $0x18] sm:$0xff]
  %v54 = vld [vmem:[%s1 + $0x20] sm:$0xff]
  %v55 = vld [vmem:[%s1 + $0x28] sm:$0xff]
  %v56 = vld [vmem:[%s1 + $0x30] sm:$0xff]
  %v57 = vld [vmem:[%s1 + $0x38] sm:$0xff]
  %v58 = vld [vmem:[%s1 + $0x40] sm:$0xff]
  %v59 = vld [vmem:[%s1 + $0x48] sm:$0xff]
  %v60 = vld [vmem:[%s1 + $0x50] sm:$0xff]
  %v61 = vld [vmem:[%s1 + $0x58] sm:$0xff]
  %v62 = vld [vmem:[%s1 + $0x60] sm:$0xff]
  %v63 = vld [vmem:[%s1 + $0x68] sm:$0xff]
  %v64 = vld [vmem:[%s1 + $0x70] sm:$0xff]
  %v65 = vld [vmem:[%s1 + $0x78] sm:$0xff]
  %v66 = vld [vmem:[%s1 + $0x80] sm:$0xff]
  %v67 = vld [vmem:[%s1 + $0x88] sm:$0xff]
  %v68 = vld [vmem:[%s2] sm:$0x1]
  %v70 = vlaneseq
  %v71 = vshrl.u32 %v70, 7
  %v72 = vsub.s32 0, %v71
  %v73 = vrot.slane %v68, %v72
  %vm75 = vcmask 130048
  %v77 = vsel %vm75, %v15, 0
  %v80 = vsel %vm75, %v17, 0
  %v83 = vsel %vm75, %v19, 0
  %v86 = vsel %vm75, %v21, 0
  %v89 = vsel %vm75, %v23, 0
  %v92 = vsel %vm75, %v25, 0
  %v95 = vsel %vm75, %v27, 0
  %v98 = vsel %vm75, %v29, 0
  %v101 = vsel %vm75, %v31, 0
  %v104 = vsel %vm75, %v33, 0
  %v107 = vsel %vm75, %v35, 0
  %v110 = vsel %vm75, %v37, 0
  %v113 = vsel %vm75, %v39, 0
  %v116 = vsel %vm75, %v41, 0
  %v119 = vsel %vm75, %v43, 0
  %v122 = vsel %vm75, %v45, 0
  %v125 = vsel %vm75, %v47, 0
  %v128 = vsel %vm75, %v49, 0
  %130 = vmatprep.subr.mxu0 0.0
  %131 = vmatpush1.msra.mxu0 %v50
  %132 = vmatprep.subr.mxu0 0.0
  %133 = vmatpush1.msra.mxu0 %v51
  %134 = vmatprep.subr.mxu0 0.0
  %135 = vmatpush1.msra.mxu0 %v52
  %136 = vmatprep.subr.mxu0 0.0
  %137 = vmatpush1.msra.mxu0 %v53
  %138 = vmatprep.subr.mxu0 0.0
  %139 = vmatpush1.msra.mxu0 %v54
  %140 = vmatprep.subr.mxu0 0.0
  %141 = vmatpush1.msra.mxu0 %v55
  %142 = vmatprep.subr.mxu0 0.0
  %143 = vmatpush1.msra.mxu0 %v56
  %144 = vmatprep.subr.mxu0 0.0
  %145 = vmatpush1.msra.mxu0 %v57
  %146 = vmatprep.subr.mxu0 0.0
  %147 = vmatpush1.msra.mxu0 %v58
  %148 = vmatprep.subr.mxu0 0.0
  %149 = vmatpush1.msra.mxu0 %v59
  %150 = vmatprep.subr.mxu0 0.0
  %151 = vmatpush1.msra.mxu0 %v60
  %152 = vmatprep.subr.mxu0 0.0
  %153 = vmatpush1.msra.mxu0 %v61
  %154 = vmatprep.subr.mxu0 0.0
  %155 = vmatpush1.msra.mxu0 %v62
  %156 = vmatprep.subr.mxu0 0.0
  %157 = vmatpush1.msra.mxu0 %v63
  %158 = vmatprep.subr.mxu0 0.0
  %159 = vmatpush1.msra.mxu0 %v64
  %160 = vmatprep.subr.mxu0 0.0
  %161 = vmatpush1.msra.mxu0 %v65
  %162 = vmatprep.subr.mxu0 0.0
  %163 = vmatpush1.msra.mxu0 %v66
  %164 = vmatprep.subr.mxu0 0.0
  %165 = vmatpush1.msra.mxu0 %v67
  %166 = vmatprep.subr.mxu0 0.0
  %167 = vmatpush1.msra.mxu0 0.0
  %168 = vmatprep.subr.mxu0 0.0
  %169 = vmatpush1.msra.mxu0 0.0
  %170 = vmatprep.subr.mxu0 0.0
  %171 = vmatpush1.msra.mxu0 0.0
  %172 = vmatprep.subr.mxu0 0.0
  %173 = vmatpush1.msra.mxu0 0.0
  %174 = vmatprep.subr.mxu0 0.0
  %175 = vmatpush1.msra.mxu0 0.0
  %176 = vmatprep.subr.mxu0 0.0
  %177 = vmatpush1.msra.mxu0 0.0
  %178 = vmatprep.subr.mxu0 0.0
  %179 = vmatpush1.msra.mxu0 0.0
  %180 = vmatprep.subr.mxu0 0.0
  %181 = vmatpush1.msra.mxu0 0.0
  %182 = vmatprep.subr.mxu0 0.0
  %183 = vmatpush1.msra.mxu0 0.0
  %184 = vmatprep.subr.mxu0 0.0
  %185 = vmatpush1.msra.mxu0 0.0
  %186 = vmatprep.subr.mxu0 0.0
  %187 = vmatpush1.msra.mxu0 0.0
  %188 = vmatprep.subr.mxu0 0.0
  %189 = vmatpush1.msra.mxu0 0.0
  %190 = vmatprep.subr.mxu0 0.0
  %191 = vmatpush1.msra.mxu0 0.0
  %192 = vmatprep.subr.mxu0 0.0
  %193 = vmatpush1.msra.mxu0 0.0
  %194 = vmatprep.mubr.f32.mxu0 %v77
  %195 = vmatmul.mubr.f32.gmra.mrb[0].mxu0 %v14
  %v196 = vpop.f32.mrb[0].mxu0
  %v197 = vadd.f32 %v73, %v196
  %v198 = vpop.f32.mrb[0].mxu0
  %199 = vmatprep.mubr.f32.mxu0 %v80
  %200 = vmatmul.mubr.f32.gmra.mrb[0].mxu0 %v16
  %v201 = vpop.f32.mrb[0].mxu0
  %v202 = vadd.f32 %v73, %v201
  %v203 = vpop.f32.mrb[0].mxu0
  %204 = vmatprep.mubr.f32.mxu0 %v83
  %205 = vmatmul.mubr.f32.gmra.mrb[0].mxu0 %v18
  %v206 = vpop.f32.mrb[0].mxu0
  %v207 = vadd.f32 %v73, %v206
  %v208 = vpop.f32.mrb[0].mxu0
  %209 = vmatprep.mubr.f32.mxu0 %v86
  %210 = vmatmul.mubr.f32.gmra.mrb[0].mxu0 %v20
  %v211 = vpop.f32.mrb[0].mxu0
  %v212 = vadd.f32 %v73, %v211
  %v213 = vpop.f32.mrb[0].mxu0
  %214 = vmatprep.mubr.f32.mxu0 %v89
  %215 = vmatmul.mubr.f32.gmra.mrb[0].mxu0 %v22
  %v216 = vpop.f32.mrb[0].mxu0
  %v217 = vadd.f32 %v73, %v216
  %v218 = vpop.f32.mrb[0].mxu0
  %219 = vmatprep.mubr.f32.mxu0 %v92
  %220 = vmatmul.mubr.f32.gmra.mrb[0].mxu0 %v24
  %v221 = vpop.f32.mrb[0].mxu0
  %v222 = vadd.f32 %v73, %v221
  %v223 = vpop.f32.mrb[0].mxu0
  %224 = vmatprep.mubr.f32.mxu0 %v95
  %225 = vmatmul.mubr.f32.gmra.mrb[0].mxu0 %v26
  %v226 = vpop.f32.mrb[0].mxu0
  %v227 = vadd.f32 %v73, %v226
  %v228 = vpop.f32.mrb[0].mxu0
  %229 = vmatprep.mubr.f32.mxu0 %v98
  %230 = vmatmul.mubr.f32.gmra.mrb[0].mxu0 %v28
  %v231 = vpop.f32.mrb[0].mxu0
  %v232 = vadd.f32 %v73, %v231
  %v233 = vpop.f32.mrb[0].mxu0
  %234 = vmatprep.mubr.f32.mxu0 %v101
  %235 = vmatmul.mubr.f32.gmra.mrb[0].mxu0 %v30
  %v236 = vpop.f32.mrb[0].mxu0
  %v237 = vadd.f32 %v73, %v236
  %v238 = vpop.f32.mrb[0].mxu0
  %239 = vmatprep.mubr.f32.mxu0 %v104
  %240 = vmatmul.mubr.f32.gmra.mrb[0].mxu0 %v32
  %v241 = vpop.f32.mrb[0].mxu0
  %v242 = vadd.f32 %v73, %v241
  %v243 = vpop.f32.mrb[0].mxu0
  %244 = vmatprep.mubr.f32.mxu0 %v107
  %245 = vmatmul.mubr.f32.gmra.mrb[0].mxu0 %v34
  %v246 = vpop.f32.mrb[0].mxu0
  %v247 = vadd.f32 %v73, %v246
  %v248 = vpop.f32.mrb[0].mxu0
  %249 = vmatprep.mubr.f32.mxu0 %v110
  %250 = vmatmul.mubr.f32.gmra.mrb[0].mxu0 %v36
  %v251 = vpop.f32.mrb[0].mxu0
  %v252 = vadd.f32 %v73, %v251
  %v253 = vpop.f32.mrb[0].mxu0
  %254 = vmatprep.mubr.f32.mxu0 %v113
  %255 = vmatmul.mubr.f32.gmra.mrb[0].mxu0 %v38
  %v256 = vpop.f32.mrb[0].mxu0
  %v257 = vadd.f32 %v73, %v256
  %v258 = vpop.f32.mrb[0].mxu0
  %259 = vmatprep.mubr.f32.mxu0 %v116
  %260 = vmatmul.mubr.f32.gmra.mrb[0].mxu0 %v40
  %v261 = vpop.f32.mrb[0].mxu0
  %v262 = vadd.f32 %v73, %v261
  %v263 = vpop.f32.mrb[0].mxu0
  %264 = vmatprep.mubr.f32.mxu0 %v119
  %265 = vmatmul.mubr.f32.gmra.mrb[0].mxu0 %v42
  %v266 = vpop.f32.mrb[0].mxu0
  %v267 = vadd.f32 %v73, %v266
  %v268 = vpop.f32.mrb[0].mxu0
  %269 = vmatprep.mubr.f32.mxu0 %v122
  %270 = vmatmul.mubr.f32.gmra.mrb[0].mxu0 %v44
  %v271 = vpop.f32.mrb[0].mxu0
  %v272 = vadd.f32 %v73, %v271
  %v273 = vpop.f32.mrb[0].mxu0
  %274 = vmatprep.mubr.f32.mxu0 %v125
  %275 = vmatmul.mubr.f32.gmra.mrb[0].mxu0 %v46
  %v276 = vpop.f32.mrb[0].mxu0
  %v277 = vadd.f32 %v73, %v276
  %v278 = vpop.f32.mrb[0].mxu0
  %279 = vmatprep.mubr.f32.mxu0 %v128
  %280 = vmatmul.mubr.f32.gmra.mrb[0].mxu0 %v48
  %v281 = vpop.f32.mrb[0].mxu0
  %v282 = vadd.f32 %v73, %v281
  %v283 = vpop.f32.mrb[0].mxu0
  %284 = vdwg.mxu0
  %vm285 = vcmask 785408
  %286 = vst.msk [vmem:[%s3] sm:$0xff] %vm285, %v197
  %287 = vst.msk [vmem:[%s3 + $0x8] sm:$0xff] %vm285, %v202
  %288 = vst.msk [vmem:[%s3 + $0x10] sm:$0xff] %vm285, %v207
  %289 = vst.msk [vmem:[%s3 + $0x18] sm:$0xff] %vm285, %v212
  %290 = vst.msk [vmem:[%s3 + $0x20] sm:$0xff] %vm285, %v217
  %291 = vst.msk [vmem:[%s3 + $0x28] sm:$0xff] %vm285, %v222
  %292 = vst.msk [vmem:[%s3 + $0x30] sm:$0xff] %vm285, %v227
  %293 = vst.msk [vmem:[%s3 + $0x38] sm:$0xff] %vm285, %v232
  %294 = vst.msk [vmem:[%s3 + $0x40] sm:$0xff] %vm285, %v237
  %295 = vst.msk [vmem:[%s3 + $0x48] sm:$0xff] %vm285, %v242
  %296 = vst.msk [vmem:[%s3 + $0x50] sm:$0xff] %vm285, %v247
  %297 = vst.msk [vmem:[%s3 + $0x58] sm:$0xff] %vm285, %v252
  %298 = vst.msk [vmem:[%s3 + $0x60] sm:$0xff] %vm285, %v257
  %299 = vst.msk [vmem:[%s3 + $0x68] sm:$0xff] %vm285, %v262
  %300 = vst.msk [vmem:[%s3 + $0x70] sm:$0xff] %vm285, %v267
  %301 = vst.msk [vmem:[%s3 + $0x78] sm:$0xff] %vm285, %v272
  %302 = vst.msk [vmem:[%s3 + $0x80] sm:$0xff] %vm285, %v277
  %303 = vst.msk [vmem:[%s3 + $0x88] sm:$0xff] %vm285, %v282
  // Predicated region
  $region14: #{_forward_impl.9} parent=0 // pred_check
    _
  $region15: #{_forward_impl.9} parent=0 // pred_check_branch
    %305 = sbr.rel (0) target = $region17
  $region16: #{_forward_impl.9} parent=0 // pred_region
    _
  $region17: #{_forward_impl.9} parent=0 // pred_fallthru
    _
  // Predicated region
  $region18: #{_forward_impl.9} parent=0 // pred_check
    _
  $region19: #{_forward_impl.9} parent=0 // pred_check_branch
    %307 = sbr.rel (0) target = $region21
  $region20: #{_forward_impl.9} parent=0 // pred_region
    _
  $region21: #{_forward_impl.9} parent=0 // pred_fallthru
    _

// kernel: _forward_impl.10
$region0: #{_forward_impl.10}
  #allocation0 [shape = 'u32[]', space=smem, size = 0x4, offset = 0x4, fixed_abs, tag = 'smem constant byte address 0x4 - core index']
  #allocation1 [shape = 'u32[144,128]{1,0:T(1,128)}', space=vmem, size = 0x12000, scoped, tag = 'internal scratch']
  %s0 = inlined_call_operand.vmem [shape: f32[200,144], index: 0, kind: input, shape index: {}]
  %s1 = inlined_call_operand.vmem [shape: f32[144,96], index: 1, kind: input, shape index: {}]
  %s2 = inlined_call_operand.vmem [shape: f32[1,96], index: 2, kind: input, shape index: {}]
  %s3 = inlined_call_operand.vmem [shape: f32[200,96], index: 3, kind: output, shape index: {}]
  %s4 = sld [smem:[#allocation0]]
  $region22: #{_forward_impl.10} parent=0
    _
  %s6 = ssub.s32 1, %s4
  %s7 = scalar_select 0, %s6, %s4
  // Predicated region
  $region2: #{_forward_impl.10} parent=0 // pred_check
    _
  $region3: #{_forward_impl.10} parent=0 // pred_check_branch
    %9 = sbr.rel (0) target = $region5
  $region4: #{_forward_impl.10} parent=0 // pred_region
    _
  $region5: #{_forward_impl.10} parent=0 // pred_fallthru
    _
  // Predicated region
  $region6: #{_forward_impl.10} parent=0 // pred_check
    _
  $region7: #{_forward_impl.10} parent=0 // pred_check_branch
    %11 = sbr.rel (0) target = $region9
  $region8: #{_forward_impl.10} parent=0 // pred_region
    _
  $region9: #{_forward_impl.10} parent=0 // pred_fallthru
    _
  // Predicated region
  $region10: #{_forward_impl.10} parent=0 // pred_check
    _
  $region11: #{_forward_impl.10} parent=0 // pred_check_branch
    %13 = sbr.rel (0) target = $region13
  $region12: #{_forward_impl.10} parent=0 // pred_region
    _
  $region13: #{_forward_impl.10} parent=0 // pred_fallthru
    _
  %v14 = vld [vmem:[%s0] sm:$0xff]
  %v15 = vld [vmem:[%s0 + $0x8] sm:$0xff]
  %v16 = vld [vmem:[%s0 + $0x10] sm:$0xff]
  %v17 = vld [vmem:[%s0 + $0x18] sm:$0xff]
  %v18 = vld [vmem:[%s0 + $0x20] sm:$0xff]
  %v19 = vld [vmem:[%s0 + $0x28] sm:$0xff]
  %v20 = vld [vmem:[%s0 + $0x30] sm:$0xff]
  %v21 = vld [vmem:[%s0 + $0x38] sm:$0xff]
  %v22 = vld [vmem:[%s0 + $0x40] sm:$0xff]
  %v23 = vld [vmem:[%s0 + $0x48] sm:$0xff]
  %v24 = vld [vmem:[%s0 + $0x50] sm:$0xff]
  %v25 = vld [vmem:[%s0 + $0x58] sm:$0xff]
  %v26 = vld [vmem:[%s0 + $0x60] sm:$0xff]
  %v27 = vld [vmem:[%s0 + $0x68] sm:$0xff]
  %v28 = vld [vmem:[%s0 + $0x70] sm:$0xff]
  %v29 = vld [vmem:[%s0 + $0x78] sm:$0xff]
  %v30 = vld [vmem:[%s0 + $0x80] sm:$0xff]
  %v31 = vld [vmem:[%s0 + $0x88] sm:$0xff]
  %v32 = vld [vmem:[%s0 + $0x90] sm:$0xff]
  %v33 = vld [vmem:[%s0 + $0x98] sm:$0xff]
  %v34 = vld [vmem:[%s0 + $0xa0] sm:$0xff]
  %v35 = vld [vmem:[%s0 + $0xa8] sm:$0xff]
  %v36 = vld [vmem:[%s0 + $0xb0] sm:$0xff]
  %v37 = vld [vmem:[%s0 + $0xb8] sm:$0xff]
  %v38 = vld [vmem:[%s0 + $0xc0] sm:$0xff]
  %v39 = vld [vmem:[%s0 + $0xc8] sm:$0xff]
  %v40 = vld [vmem:[%s0 + $0xd0] sm:$0xff]
  %v41 = vld [vmem:[%s0 + $0xd8] sm:$0xff]
  %v42 = vld [vmem:[%s0 + $0xe0] sm:$0xff]
  %v43 = vld [vmem:[%s0 + $0xe8] sm:$0xff]
  %v44 = vld [vmem:[%s0 + $0xf0] sm:$0xff]
  %v45 = vld [vmem:[%s0 + $0xf8] sm:$0xff]
  %v46 = vld [vmem:[%s0 + $0x100] sm:$0xff]
  %v47 = vld [vmem:[%s0 + $0x108] sm:$0xff]
  %v48 = vld [vmem:[%s0 + $0x110] sm:$0xff]
  %v49 = vld [vmem:[%s0 + $0x118] sm:$0xff]
  %v50 = vld [vmem:[%s0 + $0x120] sm:$0xff]
  %v51 = vld [vmem:[%s0 + $0x128] sm:$0xff]
  %v52 = vld [vmem:[%s0 + $0x130] sm:$0xff]
  %v53 = vld [vmem:[%s0 + $0x138] sm:$0xff]
  %v54 = vld [vmem:[%s0 + $0x140] sm:$0xff]
  %v55 = vld [vmem:[%s0 + $0x148] sm:$0xff]
  %v56 = vld [vmem:[%s0 + $0x150] sm:$0xff]
  %v57 = vld [vmem:[%s0 + $0x158] sm:$0xff]
  %v58 = vld [vmem:[%s0 + $0x160] sm:$0xff]
  %v59 = vld [vmem:[%s0 + $0x168] sm:$0xff]
  %v60 = vld [vmem:[%s0 + $0x170] sm:$0xff]
  %v61 = vld [vmem:[%s0 + $0x178] sm:$0xff]
  %v62 = vld [vmem:[%s0 + $0x180] sm:$0xff]
  %v63 = vld [vmem:[%s0 + $0x188] sm:$0xff]
  %v64 = vld [vmem:[%s1] sm:$0xff]
  %v65 = vld [vmem:[%s1 + $0x8] sm:$0xff]
  %v66 = vld [vmem:[%s1 + $0x10] sm:$0xff]
  %v67 = vld [vmem:[%s1 + $0x18] sm:$0xff]
  %v68 = vld [vmem:[%s1 + $0x20] sm:$0xff]
  %v69 = vld [vmem:[%s1 + $0x28] sm:$0xff]
  %v70 = vld [vmem:[%s1 + $0x30] sm:$0xff]
  %v71 = vld [vmem:[%s1 + $0x38] sm:$0xff]
  %v72 = vld [vmem:[%s1 + $0x40] sm:$0xff]
  %v73 = vld [vmem:[%s1 + $0x48] sm:$0xff]
  %v74 = vld [vmem:[%s1 + $0x50] sm:$0xff]
  %v75 = vld [vmem:[%s1 + $0x58] sm:$0xff]
  %v76 = vld [vmem:[%s1 + $0x60] sm:$0xff]
  %v77 = vld [vmem:[%s1 + $0x68] sm:$0xff]
  %v78 = vld [vmem:[%s1 + $0x70] sm:$0xff]
  %v79 = vld [vmem:[%s1 + $0x78] sm:$0xff]
  %v80 = vld [vmem:[%s1 + $0x80] sm:$0xff]
  %v81 = vld [vmem:[%s1 + $0x88] sm:$0xff]
  %v82 = vld [vmem:[%s2] sm:$0x1]
  %v84 = vlaneseq
  %v85 = vshrl.u32 %v84, 7
  %v86 = vsub.s32 0, %v85
  %v87 = vrot.slane %v82, %v86
  %vm89 = vcmask 130048
  %v91 = vsel %vm89, %v15, 0
  %v94 = vsel %vm89, %v17, 0
  %v97 = vsel %vm89, %v19, 0
  %v100 = vsel %vm89, %v21, 0
  %v103 = vsel %vm89, %v23, 0
  %v106 = vsel %vm89, %v25, 0
  %v109 = vsel %vm89, %v27, 0
  %v112 = vsel %vm89, %v29, 0
  %v115 = vsel %vm89, %v31, 0
  %v118 = vsel %vm89, %v33, 0
  %v121 = vsel %vm89, %v35, 0
  %v124 = vsel %vm89, %v37, 0
  %v127 = vsel %vm89, %v39, 0
  %v130 = vsel %vm89, %v41, 0
  %v133 = vsel %vm89, %v43, 0
  %v136 = vsel %vm89, %v45, 0
  %v139 = vsel %vm89, %v47, 0
  %v142 = vsel %vm89, %v49, 0
  %v145 = vsel %vm89, %v51, 0
  %v148 = vsel %vm89, %v53, 0
  %v151 = vsel %vm89, %v55, 0
  %v154 = vsel %vm89, %v57, 0
  %v157 = vsel %vm89, %v59, 0
  %v160 = vsel %vm89, %v61, 0
  %v163 = vsel %vm89, %v63, 0
  %165 = vmatprep.subr.mxu0 0.0
  %166 = vmatpush1.msra.mxu0 %v64
  %167 = vmatprep.subr.mxu0 0.0
  %168 = vmatpush1.msra.mxu0 %v65
  %169 = vmatprep.subr.mxu0 0.0
  %170 = vmatpush1.msra.mxu0 %v66
  %171 = vmatprep.subr.mxu0 0.0
  %172 = vmatpush1.msra.mxu0 %v67
  %173 = vmatprep.subr.mxu0 0.0
  %174 = vmatpush1.msra.mxu0 %v68
  %175 = vmatprep.subr.mxu0 0.0
  %176 = vmatpush1.msra.mxu0 %v69
  %177 = vmatprep.subr.mxu0 0.0
  %178 = vmatpush1.msra.mxu0 %v70
  %179 = vmatprep.subr.mxu0 0.0
  %180 = vmatpush1.msra.mxu0 %v71
  %181 = vmatprep.subr.mxu0 0.0
  %182 = vmatpush1.msra.mxu0 %v72
  %183 = vmatprep.subr.mxu0 0.0
  %184 = vmatpush1.msra.mxu0 %v73
  %185 = vmatprep.subr.mxu0 0.0
  %186 = vmatpush1.msra.mxu0 %v74
  %187 = vmatprep.subr.mxu0 0.0
  %188 = vmatpush1.msra.mxu0 %v75
  %189 = vmatprep.subr.mxu0 0.0
  %190 = vmatpush1.msra.mxu0 %v76
  %191 = vmatprep.subr.mxu0 0.0
  %192 = vmatpush1.msra.mxu0 %v77
  %193 = vmatprep.subr.mxu0 0.0
  %194 = vmatpush1.msra.mxu0 %v78
  %195 = vmatprep.subr.mxu0 0.0
  %196 = vmatpush1.msra.mxu0 %v79
  %197 = vmatprep.subr.mxu0 0.0
  %198 = vmatpush1.msra.mxu0 %v80
  %199 = vmatprep.subr.mxu0 0.0
  %200 = vmatpush1.msra.mxu0 %v81
  %201 = vmatprep.subr.mxu0 0.0
  %202 = vmatpush1.msra.mxu0 0.0
  %203 = vmatprep.subr.mxu0 0.0
  %204 = vmatpush1.msra.mxu0 0.0
  %205 = vmatprep.subr.mxu0 0.0
  %206 = vmatpush1.msra.mxu0 0.0
  %207 = vmatprep.subr.mxu0 0.0
  %208 = vmatpush1.msra.mxu0 0.0
  %209 = vmatprep.subr.mxu0 0.0
  %210 = vmatpush1.msra.mxu0 0.0
  %211 = vmatprep.subr.mxu0 0.0
  %212 = vmatpush1.msra.mxu0 0.0
  %213 = vmatprep.subr.mxu0 0.0
  %214 = vmatpush1.msra.mxu0 0.0
  %215 = vmatprep.subr.mxu0 0.0
  %216 = vmatpush1.msra.mxu0 0.0
  %217 = vmatprep.subr.mxu0 0.0
  %218 = vmatpush1.msra.mxu0 0.0
  %219 = vmatprep.subr.mxu0 0.0
  %220 = vmatpush1.msra.mxu0 0.0
  %221 = vmatprep.subr.mxu0 0.0
  %222 = vmatpush1.msra.mxu0 0.0
  %223 = vmatprep.subr.mxu0 0.0
  %224 = vmatpush1.msra.mxu0 0.0
  %225 = vmatprep.subr.mxu0 0.0
  %226 = vmatpush1.msra.mxu0 0.0
  %227 = vmatprep.subr.mxu0 0.0
  %228 = vmatpush1.msra.mxu0 0.0
  %229 = vmatprep.mubr.f32.mxu0 %v91
  %230 = vmatmul.mubr.f32.gmra.mrb[0].mxu0 %v14
  %v231 = vpop.f32.mrb[0].mxu0
  %v232 = vadd.f32 %v87, %v231
  %v233 = vpop.f32.mrb[0].mxu0
  %234 = vmatprep.mubr.f32.mxu0 %v94
  %235 = vmatmul.mubr.f32.gmra.mrb[0].mxu0 %v16
  %v236 = vpop.f32.mrb[0].mxu0
  %v237 = vadd.f32 %v87, %v236
  %v238 = vpop.f32.mrb[0].mxu0
  %239 = vmatprep.mubr.f32.mxu0 %v97
  %240 = vmatmul.mubr.f32.gmra.mrb[0].mxu0 %v18
  %v241 = vpop.f32.mrb[0].mxu0
  %v242 = vadd.f32 %v87, %v241
  %v243 = vpop.f32.mrb[0].mxu0
  %244 = vmatprep.mubr.f32.mxu0 %v100
  %245 = vmatmul.mubr.f32.gmra.mrb[0].mxu0 %v20
  %v246 = vpop.f32.mrb[0].mxu0
  %v247 = vadd.f32 %v87, %v246
  %v248 = vpop.f32.mrb[0].mxu0
  %249 = vmatprep.mubr.f32.mxu0 %v103
  %250 = vmatmul.mubr.f32.gmra.mrb[0].mxu0 %v22
  %v251 = vpop.f32.mrb[0].mxu0
  %v252 = vadd.f32 %v87, %v251
  %v253 = vpop.f32.mrb[0].mxu0
  %254 = vmatprep.mubr.f32.mxu0 %v106
  %255 = vmatmul.mubr.f32.gmra.mrb[0].mxu0 %v24
  %v256 = vpop.f32.mrb[0].mxu0
  %v257 = vadd.f32 %v87, %v256
  %v258 = vpop.f32.mrb[0].mxu0
  %259 = vmatprep.mubr.f32.mxu0 %v109
  %260 = vmatmul.mubr.f32.gmra.mrb[0].mxu0 %v26
  %v261 = vpop.f32.mrb[0].mxu0
  %v262 = vadd.f32 %v87, %v261
  %v263 = vpop.f32.mrb[0].mxu0
  %264 = vmatprep.mubr.f32.mxu0 %v112
  %265 = vmatmul.mubr.f32.gmra.mrb[0].mxu0 %v28
  %v266 = vpop.f32.mrb[0].mxu0
  %v267 = vadd.f32 %v87, %v266
  %v268 = vpop.f32.mrb[0].mxu0
  %269 = vmatprep.mubr.f32.mxu0 %v115
  %270 = vmatmul.mubr.f32.gmra.mrb[0].mxu0 %v30
  %v271 = vpop.f32.mrb[0].mxu0
  %v272 = vadd.f32 %v87, %v271
  %v273 = vpop.f32.mrb[0].mxu0
  %274 = vmatprep.mubr.f32.mxu0 %v118
  %275 = vmatmul.mubr.f32.gmra.mrb[0].mxu0 %v32
  %v276 = vpop.f32.mrb[0].mxu0
  %v277 = vadd.f32 %v87, %v276
  %v278 = vpop.f32.mrb[0].mxu0
  %279 = vmatprep.mubr.f32.mxu0 %v121
  %280 = vmatmul.mubr.f32.gmra.mrb[0].mxu0 %v34
  %v281 = vpop.f32.mrb[0].mxu0
  %v282 = vadd.f32 %v87, %v281
  %v283 = vpop.f32.mrb[0].mxu0
  %284 = vmatprep.mubr.f32.mxu0 %v124
  %285 = vmatmul.mubr.f32.gmra.mrb[0].mxu0 %v36
  %v286 = vpop.f32.mrb[0].mxu0
  %v287 = vadd.f32 %v87, %v286
  %v288 = vpop.f32.mrb[0].mxu0
  %289 = vmatprep.mubr.f32.mxu0 %v127
  %290 = vmatmul.mubr.f32.gmra.mrb[0].mxu0 %v38
  %v291 = vpop.f32.mrb[0].mxu0
  %v292 = vadd.f32 %v87, %v291
  %v293 = vpop.f32.mrb[0].mxu0
  %294 = vmatprep.mubr.f32.mxu0 %v130
  %295 = vmatmul.mubr.f32.gmra.mrb[0].mxu0 %v40
  %v296 = vpop.f32.mrb[0].mxu0
  %v297 = vadd.f32 %v87, %v296
  %v298 = vpop.f32.mrb[0].mxu0
  %299 = vmatprep.mubr.f32.mxu0 %v133
  %300 = vmatmul.mubr.f32.gmra.mrb[0].mxu0 %v42
  %v301 = vpop.f32.mrb[0].mxu0
  %v302 = vadd.f32 %v87, %v301
  %v303 = vpop.f32.mrb[0].mxu0
  %304 = vmatprep.mubr.f32.mxu0 %v136
  %305 = vmatmul.mubr.f32.gmra.mrb[0].mxu0 %v44
  %v306 = vpop.f32.mrb[0].mxu0
  %v307 = vadd.f32 %v87, %v306
  %v308 = vpop.f32.mrb[0].mxu0
  %309 = vmatprep.mubr.f32.mxu0 %v139
  %310 = vmatmul.mubr.f32.gmra.mrb[0].mxu0 %v46
  %v311 = vpop.f32.mrb[0].mxu0
  %v312 = vadd.f32 %v87, %v311
  %v313 = vpop.f32.mrb[0].mxu0
  %314 = vmatprep.mubr.f32.mxu0 %v142
  %315 = vmatmul.mubr.f32.gmra.mrb[0].mxu0 %v48
  %v316 = vpop.f32.mrb[0].mxu0
  %v317 = vadd.f32 %v87, %v316
  %v318 = vpop.f32.mrb[0].mxu0
  %319 = vmatprep.mubr.f32.mxu0 %v145
  %320 = vmatmul.mubr.f32.gmra.mrb[0].mxu0 %v50
  %v321 = vpop.f32.mrb[0].mxu0
  %v322 = vadd.f32 %v87, %v321
  %v323 = vpop.f32.mrb[0].mxu0
  %324 = vmatprep.mubr.f32.mxu0 %v148
  %325 = vmatmul.mubr.f32.gmra.mrb[0].mxu0 %v52
  %v326 = vpop.f32.mrb[0].mxu0
  %v327 = vadd.f32 %v87, %v326
  %v328 = vpop.f32.mrb[0].mxu0
  %329 = vmatprep.mubr.f32.mxu0 %v151
  %330 = vmatmul.mubr.f32.gmra.mrb[0].mxu0 %v54
  %v331 = vpop.f32.mrb[0].mxu0
  %v332 = vadd.f32 %v87, %v331
  %v333 = vpop.f32.mrb[0].mxu0
  %334 = vmatprep.mubr.f32.mxu0 %v154
  %335 = vmatmul.mubr.f32.gmra.mrb[0].mxu0 %v56
  %v336 = vpop.f32.mrb[0].mxu0
  %v337 = vadd.f32 %v87, %v336
  %v338 = vpop.f32.mrb[0].mxu0
  %339 = vmatprep.mubr.f32.mxu0 %v157
  %340 = vmatmul.mubr.f32.gmra.mrb[0].mxu0 %v58
  %v341 = vpop.f32.mrb[0].mxu0
  %v342 = vadd.f32 %v87, %v341
  %v343 = vpop.f32.mrb[0].mxu0
  %344 = vmatprep.mubr.f32.mxu0 %v160
  %345 = vmatmul.mubr.f32.gmra.mrb[0].mxu0 %v60
  %v346 = vpop.f32.mrb[0].mxu0
  %v347 = vadd.f32 %v87, %v346
  %v348 = vpop.f32.mrb[0].mxu0
  %349 = vmatprep.mubr.f32.mxu0 %v163
  %350 = vmatmul.mubr.f32.gmra.mrb[0].mxu0 %v62
  %v351 = vpop.f32.mrb[0].mxu0
  %v352 = vadd.f32 %v87, %v351
  %v353 = vpop.f32.mrb[0].mxu0
  %354 = vdwg.mxu0
  %vm355 = vcmask 785408
  %356 = vst.msk [vmem:[%s3] sm:$0xff] %vm355, %v232
  %357 = vst.msk [vmem:[%s3 + $0x8] sm:$0xff] %vm355, %v237
  %358 = vst.msk [vmem:[%s3 + $0x10] sm:$0xff] %vm355, %v242
  %359 = vst.msk [vmem:[%s3 + $0x18] sm:$0xff] %vm355, %v247
  %360 = vst.msk [vmem:[%s3 + $0x20] sm:$0xff] %vm355, %v252
  %361 = vst.msk [vmem:[%s3 + $0x28] sm:$0xff] %vm355, %v257
  %362 = vst.msk [vmem:[%s3 + $0x30] sm:$0xff] %vm355, %v262
  %363 = vst.msk [vmem:[%s3 + $0x38] sm:$0xff] %vm355, %v267
  %364 = vst.msk [vmem:[%s3 + $0x40] sm:$0xff] %vm355, %v272
  %365 = vst.msk [vmem:[%s3 + $0x48] sm:$0xff] %vm355, %v277
  %366 = vst.msk [vmem:[%s3 + $0x50] sm:$0xff] %vm355, %v282
  %367 = vst.msk [vmem:[%s3 + $0x58] sm:$0xff] %vm355, %v287
  %368 = vst.msk [vmem:[%s3 + $0x60] sm:$0xff] %vm355, %v292
  %369 = vst.msk [vmem:[%s3 + $0x68] sm:$0xff] %vm355, %v297
  %370 = vst.msk [vmem:[%s3 + $0x70] sm:$0xff] %vm355, %v302
  %371 = vst.msk [vmem:[%s3 + $0x78] sm:$0xff] %vm355, %v307
  %372 = vst.msk [vmem:[%s3 + $0x80] sm:$0xff] %vm355, %v312
  %373 = vst.msk [vmem:[%s3 + $0x88] sm:$0xff] %vm355, %v317
  %374 = vst.msk [vmem:[%s3 + $0x90] sm:$0xff] %vm355, %v322
  %375 = vst.msk [vmem:[%s3 + $0x98] sm:$0xff] %vm355, %v327
  %376 = vst.msk [vmem:[%s3 + $0xa0] sm:$0xff] %vm355, %v332
  %377 = vst.msk [vmem:[%s3 + $0xa8] sm:$0xff] %vm355, %v337
  %378 = vst.msk [vmem:[%s3 + $0xb0] sm:$0xff] %vm355, %v342
  %379 = vst.msk [vmem:[%s3 + $0xb8] sm:$0xff] %vm355, %v347
  %380 = vst.msk [vmem:[%s3 + $0xc0] sm:$0xff] %vm355, %v352
  // Predicated region
  $region14: #{_forward_impl.10} parent=0 // pred_check
    _
  $region15: #{_forward_impl.10} parent=0 // pred_check_branch
    %382 = sbr.rel (0) target = $region17
  $region16: #{_forward_impl.10} parent=0 // pred_region
    _
  $region17: #{_forward_impl.10} parent=0 // pred_fallthru
    _
  // Predicated region
  $region18: #{_forward_impl.10} parent=0 // pred_check
    _
  $region19: #{_forward_impl.10} parent=0 // pred_check_branch
    %384 = sbr.rel (0) target = $region21
  $region20: #{_forward_impl.10} parent=0 // pred_region
    _
  $region21: #{_forward_impl.10} parent=0 // pred_fallthru
    _

// kernel: _forward_impl.8
$region0: #{_forward_impl.8}
  #allocation0 [shape = 'u32[]', space=smem, size = 0x4, offset = 0x4, fixed_abs, tag = 'smem constant byte address 0x4 - core index']
  #allocation1 [shape = 'u32[144,128]{1,0:T(1,128)}', space=vmem, size = 0x12000, scoped, tag = 'internal scratch']
  %s0 = inlined_call_operand.vmem [shape: f32[104,144], index: 0, kind: input, shape index: {}]
  %s1 = inlined_call_operand.vmem [shape: f32[144,96], index: 1, kind: input, shape index: {}]
  %s2 = inlined_call_operand.vmem [shape: f32[1,96], index: 2, kind: input, shape index: {}]
  %s3 = inlined_call_operand.vmem [shape: f32[104,96], index: 3, kind: output, shape index: {}]
  %s4 = sld [smem:[#allocation0]]
  $region22: #{_forward_impl.8} parent=0
    _
  %s6 = ssub.s32 1, %s4
  %s7 = scalar_select 0, %s6, %s4
  // Predicated region
  $region2: #{_forward_impl.8} parent=0 // pred_check
    _
  $region3: #{_forward_impl.8} parent=0 // pred_check_branch
    %9 = sbr.rel (0) target = $region5
  $region4: #{_forward_impl.8} parent=0 // pred_region
    _
  $region5: #{_forward_impl.8} parent=0 // pred_fallthru
    _
  // Predicated region
  $region6: #{_forward_impl.8} parent=0 // pred_check
    _
  $region7: #{_forward_impl.8} parent=0 // pred_check_branch
    %11 = sbr.rel (0) target = $region9
  $region8: #{_forward_impl.8} parent=0 // pred_region
    _
  $region9: #{_forward_impl.8} parent=0 // pred_fallthru
    _
  // Predicated region
  $region10: #{_forward_impl.8} parent=0 // pred_check
    _
  $region11: #{_forward_impl.8} parent=0 // pred_check_branch
    %13 = sbr.rel (0) target = $region13
  $region12: #{_forward_impl.8} parent=0 // pred_region
    _
  $region13: #{_forward_impl.8} parent=0 // pred_fallthru
    _
  %v14 = vld [vmem:[%s0] sm:$0xff]
  %v15 = vld [vmem:[%s0 + $0x8] sm:$0xff]
  %v16 = vld [vmem:[%s0 + $0x10] sm:$0xff]
  %v17 = vld [vmem:[%s0 + $0x18] sm:$0xff]
  %v18 = vld [vmem:[%s0 + $0x20] sm:$0xff]
  %v19 = vld [vmem:[%s0 + $0x28] sm:$0xff]
  %v20 = vld [vmem:[%s0 + $0x30] sm:$0xff]
  %v21 = vld [vmem:[%s0 + $0x38] sm:$0xff]
  %v22 = vld [vmem:[%s0 + $0x40] sm:$0xff]
  %v23 = vld [vmem:[%s0 + $0x48] sm:$0xff]
  %v24 = vld [vmem:[%s0 + $0x50] sm:$0xff]
  %v25 = vld [vmem:[%s0 + $0x58] sm:$0xff]
  %v26 = vld [vmem:[%s0 + $0x60] sm:$0xff]
  %v27 = vld [vmem:[%s0 + $0x68] sm:$0xff]
  %v28 = vld [vmem:[%s0 + $0x70] sm:$0xff]
  %v29 = vld [vmem:[%s0 + $0x78] sm:$0xff]
  %v30 = vld [vmem:[%s0 + $0x80] sm:$0xff]
  %v31 = vld [vmem:[%s0 + $0x88] sm:$0xff]
  %v32 = vld [vmem:[%s0 + $0x90] sm:$0xff]
  %v33 = vld [vmem:[%s0 + $0x98] sm:$0xff]
  %v34 = vld [vmem:[%s0 + $0xa0] sm:$0xff]
  %v35 = vld [vmem:[%s0 + $0xa8] sm:$0xff]
  %v36 = vld [vmem:[%s0 + $0xb0] sm:$0xff]
  %v37 = vld [vmem:[%s0 + $0xb8] sm:$0xff]
  %v38 = vld [vmem:[%s0 + $0xc0] sm:$0xff]
  %v39 = vld [vmem:[%s0 + $0xc8] sm:$0xff]
  %v40 = vld [vmem:[%s1] sm:$0xff]
  %v41 = vld [vmem:[%s1 + $0x8] sm:$0xff]
  %v42 = vld [vmem:[%s1 + $0x10] sm:$0xff]
  %v43 = vld [vmem:[%s1 + $0x18] sm:$0xff]
  %v44 = vld [vmem:[%s1 + $0x20] sm:$0xff]
  %v45 = vld [vmem:[%s1 + $0x28] sm:$0xff]
  %v46 = vld [vmem:[%s1 + $0x30] sm:$0xff]
  %v47 = vld [vmem:[%s1 + $0x38] sm:$0xff]
  %v48 = vld [vmem:[%s1 + $0x40] sm:$0xff]
  %v49 = vld [vmem:[%s1 + $0x48] sm:$0xff]
  %v50 = vld [vmem:[%s1 + $0x50] sm:$0xff]
  %v51 = vld [vmem:[%s1 + $0x58] sm:$0xff]
  %v52 = vld [vmem:[%s1 + $0x60] sm:$0xff]
  %v53 = vld [vmem:[%s1 + $0x68] sm:$0xff]
  %v54 = vld [vmem:[%s1 + $0x70] sm:$0xff]
  %v55 = vld [vmem:[%s1 + $0x78] sm:$0xff]
  %v56 = vld [vmem:[%s1 + $0x80] sm:$0xff]
  %v57 = vld [vmem:[%s1 + $0x88] sm:$0xff]
  %v58 = vld [vmem:[%s2] sm:$0x1]
  %v60 = vlaneseq
  %v61 = vshrl.u32 %v60, 7
  %v62 = vsub.s32 0, %v61
  %v63 = vrot.slane %v58, %v62
  %vm65 = vcmask 130048
  %v67 = vsel %vm65, %v15, 0
  %v70 = vsel %vm65, %v17, 0
  %v73 = vsel %vm65, %v19, 0
  %v76 = vsel %vm65, %v21, 0
  %v79 = vsel %vm65, %v23, 0
  %v82 = vsel %vm65, %v25, 0
  %v85 = vsel %vm65, %v27, 0
  %v88 = vsel %vm65, %v29, 0
  %v91 = vsel %vm65, %v31, 0
  %v94 = vsel %vm65, %v33, 0
  %v97 = vsel %vm65, %v35, 0
  %v100 = vsel %vm65, %v37, 0
  %v103 = vsel %vm65, %v39, 0
  %105 = vmatprep.subr.mxu0 0.0
  %106 = vmatpush1.msra.mxu0 %v40
  %107 = vmatprep.subr.mxu0 0.0
  %108 = vmatpush1.msra.mxu0 %v41
  %109 = vmatprep.subr.mxu0 0.0
  %110 = vmatpush1.msra.mxu0 %v42
  %111 = vmatprep.subr.mxu0 0.0
  %112 = vmatpush1.msra.mxu0 %v43
  %113 = vmatprep.subr.mxu0 0.0
  %114 = vmatpush1.msra.mxu0 %v44
  %115 = vmatprep.subr.mxu0 0.0
  %116 = vmatpush1.msra.mxu0 %v45
  %117 = vmatprep.subr.mxu0 0.0
  %118 = vmatpush1.msra.mxu0 %v46
  %119 = vmatprep.subr.mxu0 0.0
  %120 = vmatpush1.msra.mxu0 %v47
  %121 = vmatprep.subr.mxu0 0.0
  %122 = vmatpush1.msra.mxu0 %v48
  %123 = vmatprep.subr.mxu0 0.0
  %124 = vmatpush1.msra.mxu0 %v49
  %125 = vmatprep.subr.mxu0 0.0
  %126 = vmatpush1.msra.mxu0 %v50
  %127 = vmatprep.subr.mxu0 0.0
  %128 = vmatpush1.msra.mxu0 %v51
  %129 = vmatprep.subr.mxu0 0.0
  %130 = vmatpush1.msra.mxu0 %v52
  %131 = vmatprep.subr.mxu0 0.0
  %132 = vmatpush1.msra.mxu0 %v53
  %133 = vmatprep.subr.mxu0 0.0
  %134 = vmatpush1.msra.mxu0 %v54
  %135 = vmatprep.subr.mxu0 0.0
  %136 = vmatpush1.msra.mxu0 %v55
  %137 = vmatprep.subr.mxu0 0.0
  %138 = vmatpush1.msra.mxu0 %v56
  %139 = vmatprep.subr.mxu0 0.0
  %140 = vmatpush1.msra.mxu0 %v57
  %141 = vmatprep.subr.mxu0 0.0
  %142 = vmatpush1.msra.mxu0 0.0
  %143 = vmatprep.subr.mxu0 0.0
  %144 = vmatpush1.msra.mxu0 0.0
  %145 = vmatprep.subr.mxu0 0.0
  %146 = vmatpush1.msra.mxu0 0.0
  %147 = vmatprep.subr.mxu0 0.0
  %148 = vmatpush1.msra.mxu0 0.0
  %149 = vmatprep.subr.mxu0 0.0
  %150 = vmatpush1.msra.mxu0 0.0
  %151 = vmatprep.subr.mxu0 0.0
  %152 = vmatpush1.msra.mxu0 0.0
  %153 = vmatprep.subr.mxu0 0.0
  %154 = vmatpush1.msra.mxu0 0.0
  %155 = vmatprep.subr.mxu0 0.0
  %156 = vmatpush1.msra.mxu0 0.0
  %157 = vmatprep.subr.mxu0 0.0
  %158 = vmatpush1.msra.mxu0 0.0
  %159 = vmatprep.subr.mxu0 0.0
  %160 = vmatpush1.msra.mxu0 0.0
  %161 = vmatprep.subr.mxu0 0.0
  %162 = vmatpush1.msra.mxu0 0.0
  %163 = vmatprep.subr.mxu0 0.0
  %164 = vmatpush1.msra.mxu0 0.0
  %165 = vmatprep.subr.mxu0 0.0
  %166 = vmatpush1.msra.mxu0 0.0
  %167 = vmatprep.subr.mxu0 0.0
  %168 = vmatpush1.msra.mxu0 0.0
  %169 = vmatprep.mubr.f32.mxu0 %v67
  %170 = vmatmul.mubr.f32.gmra.mrb[0].mxu0 %v14
  %v171 = vpop.f32.mrb[0].mxu0
  %v172 = vadd.f32 %v63, %v171
  %v173 = vpop.f32.mrb[0].mxu0
  %174 = vmatprep.mubr.f32.mxu0 %v70
  %175 = vmatmul.mubr.f32.gmra.mrb[0].mxu0 %v16
  %v176 = vpop.f32.mrb[0].mxu0
  %v177 = vadd.f32 %v63, %v176
  %v178 = vpop.f32.mrb[0].mxu0
  %179 = vmatprep.mubr.f32.mxu0 %v73
  %180 = vmatmul.mubr.f32.gmra.mrb[0].mxu0 %v18
  %v181 = vpop.f32.mrb[0].mxu0
  %v182 = vadd.f32 %v63, %v181
  %v183 = vpop.f32.mrb[0].mxu0
  %184 = vmatprep.mubr.f32.mxu0 %v76
  %185 = vmatmul.mubr.f32.gmra.mrb[0].mxu0 %v20
  %v186 = vpop.f32.mrb[0].mxu0
  %v187 = vadd.f32 %v63, %v186
  %v188 = vpop.f32.mrb[0].mxu0
  %189 = vmatprep.mubr.f32.mxu0 %v79
  %190 = vmatmul.mubr.f32.gmra.mrb[0].mxu0 %v22
  %v191 = vpop.f32.mrb[0].mxu0
  %v192 = vadd.f32 %v63, %v191
  %v193 = vpop.f32.mrb[0].mxu0
  %194 = vmatprep.mubr.f32.mxu0 %v82
  %195 = vmatmul.mubr.f32.gmra.mrb[0].mxu0 %v24
  %v196 = vpop.f32.mrb[0].mxu0
  %v197 = vadd.f32 %v63, %v196
  %v198 = vpop.f32.mrb[0].mxu0
  %199 = vmatprep.mubr.f32.mxu0 %v85
  %200 = vmatmul.mubr.f32.gmra.mrb[0].mxu0 %v26
  %v201 = vpop.f32.mrb[0].mxu0
  %v202 = vadd.f32 %v63, %v201
  %v203 = vpop.f32.mrb[0].mxu0
  %204 = vmatprep.mubr.f32.mxu0 %v88
  %205 = vmatmul.mubr.f32.gmra.mrb[0].mxu0 %v28
  %v206 = vpop.f32.mrb[0].mxu0
  %v207 = vadd.f32 %v63, %v206
  %v208 = vpop.f32.mrb[0].mxu0
  %209 = vmatprep.mubr.f32.mxu0 %v91
  %210 = vmatmul.mubr.f32.gmra.mrb[0].mxu0 %v30
  %v211 = vpop.f32.mrb[0].mxu0
  %v212 = vadd.f32 %v63, %v211
  %v213 = vpop.f32.mrb[0].mxu0
  %214 = vmatprep.mubr.f32.mxu0 %v94
  %215 = vmatmul.mubr.f32.gmra.mrb[0].mxu0 %v32
  %v216 = vpop.f32.mrb[0].mxu0
  %v217 = vadd.f32 %v63, %v216
  %v218 = vpop.f32.mrb[0].mxu0
  %219 = vmatprep.mubr.f32.mxu0 %v97
  %220 = vmatmul.mubr.f32.gmra.mrb[0].mxu0 %v34
  %v221 = vpop.f32.mrb[0].mxu0
  %v222 = vadd.f32 %v63, %v221
  %v223 = vpop.f32.mrb[0].mxu0
  %224 = vmatprep.mubr.f32.mxu0 %v100
  %225 = vmatmul.mubr.f32.gmra.mrb[0].mxu0 %v36
  %v226 = vpop.f32.mrb[0].mxu0
  %v227 = vadd.f32 %v63, %v226
  %v228 = vpop.f32.mrb[0].mxu0
  %229 = vmatprep.mubr.f32.mxu0 %v103
  %230 = vmatmul.mubr.f32.gmra.mrb[0].mxu0 %v38
  %v231 = vpop.f32.mrb[0].mxu0
  %v232 = vadd.f32 %v63, %v231
  %v233 = vpop.f32.mrb[0].mxu0
  %234 = vdwg.mxu0
  %vm235 = vcmask 785408
  %236 = vst.msk [vmem:[%s3] sm:$0xff] %vm235, %v172
  %237 = vst.msk [vmem:[%s3 + $0x8] sm:$0xff] %vm235, %v177
  %238 = vst.msk [vmem:[%s3 + $0x10] sm:$0xff] %vm235, %v182
  %239 = vst.msk [vmem:[%s3 + $0x18] sm:$0xff] %vm235, %v187
  %240 = vst.msk [vmem:[%s3 + $0x20] sm:$0xff] %vm235, %v192
  %241 = vst.msk [vmem:[%s3 + $0x28] sm:$0xff] %vm235, %v197
  %242 = vst.msk [vmem:[%s3 + $0x30] sm:$0xff] %vm235, %v202
  %243 = vst.msk [vmem:[%s3 + $0x38] sm:$0xff] %vm235, %v207
  %244 = vst.msk [vmem:[%s3 + $0x40] sm:$0xff] %vm235, %v212
  %245 = vst.msk [vmem:[%s3 + $0x48] sm:$0xff] %vm235, %v217
  %246 = vst.msk [vmem:[%s3 + $0x50] sm:$0xff] %vm235, %v222
  %247 = vst.msk [vmem:[%s3 + $0x58] sm:$0xff] %vm235, %v227
  %248 = vst.msk [vmem:[%s3 + $0x60] sm:$0xff] %vm235, %v232
  // Predicated region
  $region14: #{_forward_impl.8} parent=0 // pred_check
    _
  $region15: #{_forward_impl.8} parent=0 // pred_check_branch
    %250 = sbr.rel (0) target = $region17
  $region16: #{_forward_impl.8} parent=0 // pred_region
    _
  $region17: #{_forward_impl.8} parent=0 // pred_fallthru
    _
  // Predicated region
  $region18: #{_forward_impl.8} parent=0 // pred_check
    _
  $region19: #{_forward_impl.8} parent=0 // pred_check_branch
    %252 = sbr.rel (0) target = $region21
  $region20: #{_forward_impl.8} parent=0 // pred_region
    _
  $region21: #{_forward_impl.8} parent=0 // pred_fallthru
    _

// kernel: _forward_impl.11
$region0: #{_forward_impl.11}
  #allocation0 [shape = 'u32[]', space=smem, size = 0x4, offset = 0x4, fixed_abs, tag = 'smem constant byte address 0x4 - core index']
  #allocation1 [shape = 'u32[144,128]{1,0:T(1,128)}', space=vmem, size = 0x12000, scoped, tag = 'internal scratch']
  %s0 = inlined_call_operand.vmem [shape: f32[144,48], index: 0, kind: input, shape index: {}]
  %s1 = inlined_call_operand.vmem [shape: f32[48,288], index: 1, kind: input, shape index: {}]
  %s2 = inlined_call_operand.vmem [shape: f32[1,288], index: 2, kind: input, shape index: {}]
  %s3 = inlined_call_operand.vmem [shape: f32[144,288], index: 3, kind: output, shape index: {}]
  %s4 = sld [smem:[#allocation0]]
  $region22: #{_forward_impl.11} parent=0
    _
  %s6 = ssub.s32 1, %s4
  %s7 = scalar_select 0, %s6, %s4
  // Predicated region
  $region2: #{_forward_impl.11} parent=0 // pred_check
    _
  $region3: #{_forward_impl.11} parent=0 // pred_check_branch
    %9 = sbr.rel (0) target = $region5
  $region4: #{_forward_impl.11} parent=0 // pred_region
    _
  $region5: #{_forward_impl.11} parent=0 // pred_fallthru
    _
  // Predicated region
  $region6: #{_forward_impl.11} parent=0 // pred_check
    _
  $region7: #{_forward_impl.11} parent=0 // pred_check_branch
    %11 = sbr.rel (0) target = $region9
  $region8: #{_forward_impl.11} parent=0 // pred_region
    _
  $region9: #{_forward_impl.11} parent=0 // pred_fallthru
    _
  // Predicated region
  $region10: #{_forward_impl.11} parent=0 // pred_check
    _
  $region11: #{_forward_impl.11} parent=0 // pred_check_branch
    %13 = sbr.rel (0) target = $region13
  $region12: #{_forward_impl.11} parent=0 // pred_region
    _
  $region13: #{_forward_impl.11} parent=0 // pred_fallthru
    _
  %v14 = vld [vmem:[%s0] sm:$0xff]
  %v15 = vld [vmem:[%s0 + $0x8] sm:$0xff]
  %v16 = vld [vmem:[%s0 + $0x10] sm:$0xff]
  %v17 = vld [vmem:[%s0 + $0x18] sm:$0xff]
  %v18 = vld [vmem:[%s0 + $0x20] sm:$0xff]
  %v19 = vld [vmem:[%s0 + $0x28] sm:$0xff]
  %v20 = vld [vmem:[%s0 + $0x30] sm:$0xff]
  %v21 = vld [vmem:[%s0 + $0x38] sm:$0xff]
  %v22 = vld [vmem:[%s0 + $0x40] sm:$0xff]
  %v23 = vld [vmem:[%s0 + $0x48] sm:$0xff]
  %v24 = vld [vmem:[%s0 + $0x50] sm:$0xff]
  %v25 = vld [vmem:[%s0 + $0x58] sm:$0xff]
  %v26 = vld [vmem:[%s0 + $0x60] sm:$0xff]
  %v27 = vld [vmem:[%s0 + $0x68] sm:$0xff]
  %v28 = vld [vmem:[%s0 + $0x70] sm:$0xff]
  %v29 = vld [vmem:[%s0 + $0x78] sm:$0xff]
  %v30 = vld [vmem:[%s0 + $0x80] sm:$0xff]
  %v31 = vld [vmem:[%s0 + $0x88] sm:$0xff]
  %v32 = vld [vmem:[%s1] sm:$0xff]
  %v33 = vld [vmem:[%s1 + $0x8] sm:$0xff]
  %v34 = vld [vmem:[%s1 + $0x10] sm:$0xff]
  %v35 = vld [vmem:[%s1 + $0x18] sm:$0xff]
  %v36 = vld [vmem:[%s1 + $0x20] sm:$0xff]
  %v37 = vld [vmem:[%s1 + $0x28] sm:$0xff]
  %v38 = vld [vmem:[%s1 + $0x30] sm:$0xff]
  %v39 = vld [vmem:[%s1 + $0x38] sm:$0xff]
  %v40 = vld [vmem:[%s1 + $0x40] sm:$0xff]
  %v41 = vld [vmem:[%s1 + $0x48] sm:$0xff]
  %v42 = vld [vmem:[%s1 + $0x50] sm:$0xff]
  %v43 = vld [vmem:[%s1 + $0x58] sm:$0xff]
  %v44 = vld [vmem:[%s1 + $0x60] sm:$0xff]
  %v45 = vld [vmem:[%s1 + $0x68] sm:$0xff]
  %v46 = vld [vmem:[%s1 + $0x70] sm:$0xff]
  %v47 = vld [vmem:[%s1 + $0x78] sm:$0xff]
  %v48 = vld [vmem:[%s1 + $0x80] sm:$0xff]
  %v49 = vld [vmem:[%s1 + $0x88] sm:$0xff]
  %v50 = vld [vmem:[%s2] sm:$0x7]
  %v52 = vlaneseq
  %v53 = vshrl.u32 %v52, 7
  %v54 = vsub.s32 0, %v53
  %v55 = vrot.slane %v50, %v54
  %v56 = vlaneseq
  %v57 = vshrl.u32 %v56, 7
  %v58 = vsub.s32 1, %v57
  %v59 = vrot.slane %v50, %v58
  %v60 = vlaneseq
  %v61 = vshrl.u32 %v60, 7
  %v62 = vsub.s32 2, %v61
  %v63 = vrot.slane %v50, %v62
  %vm67 = vcmask 392192
  %v69 = vsel %vm67, %v14, 0
  %v72 = vsel %vm67, %v15, 0
  %v75 = vsel %vm67, %v16, 0
  %v78 = vsel %vm67, %v17, 0
  %v81 = vsel %vm67, %v18, 0
  %v84 = vsel %vm67, %v19, 0
  %v87 = vsel %vm67, %v20, 0
  %v90 = vsel %vm67, %v21, 0
  %v93 = vsel %vm67, %v22, 0
  %v96 = vsel %vm67, %v23, 0
  %v99 = vsel %vm67, %v24, 0
  %v102 = vsel %vm67, %v25, 0
  %v105 = vsel %vm67, %v26, 0
  %v108 = vsel %vm67, %v27, 0
  %v111 = vsel %vm67, %v28, 0
  %v114 = vsel %vm67, %v29, 0
  %v117 = vsel %vm67, %v30, 0
  %v120 = vsel %vm67, %v31, 0
  %122 = vmatprep.subr.mxu0 %v33
  %123 = vmatpush1.msra.mxu0 %v32
  %124 = vmatprep.subr.mxu0 %v36
  %125 = vmatpush1.msra.mxu0 %v35
  %126 = vmatprep.subr.mxu0 %v39
  %127 = vmatpush1.msra.mxu0 %v38
  %128 = vmatprep.subr.mxu0 %v42
  %129 = vmatpush1.msra.mxu0 %v41
  %130 = vmatprep.subr.mxu0 %v45
  %131 = vmatpush1.msra.mxu0 %v44
  %132 = vmatprep.subr.mxu0 %v48
  %133 = vmatpush1.msra.mxu0 %v47
  %134 = vmatprep.subr.mxu0 0.0
  %135 = vmatpush1.msra.mxu0 0.0
  %136 = vmatprep.subr.mxu0 0.0
  %137 = vmatpush1.msra.mxu0 0.0
  %138 = vmatprep.subr.mxu0 0.0
  %139 = vmatpush1.msra.mxu0 0.0
  %140 = vmatprep.subr.mxu0 0.0
  %141 = vmatpush1.msra.mxu0 0.0
  %142 = vmatprep.subr.mxu0 0.0
  %143 = vmatpush1.msra.mxu0 0.0
  %144 = vmatprep.subr.mxu0 0.0
  %145 = vmatpush1.msra.mxu0 0.0
  %146 = vmatprep.subr.mxu0 0.0
  %147 = vmatpush1.msra.mxu0 0.0
  %148 = vmatprep.subr.mxu0 0.0
  %149 = vmatpush1.msra.mxu0 0.0
  %150 = vmatprep.subr.mxu0 0.0
  %151 = vmatpush1.msra.mxu0 0.0
  %152 = vmatprep.subr.mxu0 0.0
  %153 = vmatpush1.msra.mxu0 0.0
  %154 = vmatprep.subr.mxu0 0.0
  %155 = vmatpush1.msra.mxu0 0.0
  %156 = vmatprep.subr.mxu0 0.0
  %157 = vmatpush1.msra.mxu0 0.0
  %158 = vmatprep.subr.mxu0 0.0
  %159 = vmatpush1.msra.mxu0 0.0
  %160 = vmatprep.subr.mxu0 0.0
  %161 = vmatpush1.msra.mxu0 0.0
  %162 = vmatprep.subr.mxu0 0.0
  %163 = vmatpush1.msra.mxu0 0.0
  %164 = vmatprep.subr.mxu0 0.0
  %165 = vmatpush1.msra.mxu0 0.0
  %166 = vmatprep.subr.mxu0 0.0
  %167 = vmatpush1.msra.mxu0 0.0
  %168 = vmatprep.subr.mxu0 0.0
  %169 = vmatpush1.msra.mxu0 0.0
  %170 = vmatprep.subr.mxu0 0.0
  %171 = vmatpush1.msra.mxu0 0.0
  %172 = vmatprep.subr.mxu0 0.0
  %173 = vmatpush1.msra.mxu0 0.0
  %174 = vmatprep.subr.mxu0 0.0
  %175 = vmatpush1.msra.mxu0 0.0
  %176 = vmatprep.subr.mxu0 0.0
  %177 = vmatpush1.msra.mxu0 0.0
  %178 = vmatprep.subr.mxu0 0.0
  %179 = vmatpush1.msra.mxu0 0.0
  %180 = vmatprep.subr.mxu0 0.0
  %181 = vmatpush1.msra.mxu0 0.0
  %182 = vmatprep.subr.mxu0 0.0
  %183 = vmatpush1.msra.mxu0 0.0
  %184 = vmatprep.subr.mxu0 0.0
  %185 = vmatpush1.msra.mxu0 0.0
  %186 = vmatprep.mubr.f32.mxu0 0.0
  %187 = vmatmul.mubr.f32.gmra.mrb[0].mxu0 %v69
  %v188 = vpop.f32.mrb[0].mxu0
  %v189 = vadd.f32 %v55, %v188
  %v190 = vpop.f32.mrb[0].mxu0
  %v191 = vadd.f32 %v59, %v190
  %192 = vmatprep.mubr.f32.mxu0 0.0
  %193 = vmatmul.mubr.f32.gmra.mrb[0].mxu0 %v72
  %v194 = vpop.f32.mrb[0].mxu0
  %v195 = vadd.f32 %v55, %v194
  %v196 = vpop.f32.mrb[0].mxu0
  %v197 = vadd.f32 %v59, %v196
  %198 = vmatprep.mubr.f32.mxu0 0.0
  %199 = vmatmul.mubr.f32.gmra.mrb[0].mxu0 %v75
  %v200 = vpop.f32.mrb[0].mxu0
  %v201 = vadd.f32 %v55, %v200
  %v202 = vpop.f32.mrb[0].mxu0
  %v203 = vadd.f32 %v59, %v202
  %204 = vmatprep.mubr.f32.mxu0 0.0
  %205 = vmatmul.mubr.f32.gmra.mrb[0].mxu0 %v78
  %v206 = vpop.f32.mrb[0].mxu0
  %v207 = vadd.f32 %v55, %v206
  %v208 = vpop.f32.mrb[0].mxu0
  %v209 = vadd.f32 %v59, %v208
  %210 = vmatprep.mubr.f32.mxu0 0.0
  %211 = vmatmul.mubr.f32.gmra.mrb[0].mxu0 %v81
  %v212 = vpop.f32.mrb[0].mxu0
  %v213 = vadd.f32 %v55, %v212
  %v214 = vpop.f32.mrb[0].mxu0
  %v215 = vadd.f32 %v59, %v214
  %216 = vmatprep.mubr.f32.mxu0 0.0
  %217 = vmatmul.mubr.f32.gmra.mrb[0].mxu0 %v84
  %v218 = vpop.f32.mrb[0].mxu0
  %v219 = vadd.f32 %v55, %v218
  %v220 = vpop.f32.mrb[0].mxu0
  %v221 = vadd.f32 %v59, %v220
  %222 = vmatprep.mubr.f32.mxu0 0.0
  %223 = vmatmul.mubr.f32.gmra.mrb[0].mxu0 %v87
  %v224 = vpop.f32.mrb[0].mxu0
  %v225 = vadd.f32 %v55, %v224
  %v226 = vpop.f32.mrb[0].mxu0
  %v227 = vadd.f32 %v59, %v226
  %228 = vmatprep.mubr.f32.mxu0 0.0
  %229 = vmatmul.mubr.f32.gmra.mrb[0].mxu0 %v90
  %v230 = vpop.f32.mrb[0].mxu0
  %v231 = vadd.f32 %v55, %v230
  %v232 = vpop.f32.mrb[0].mxu0
  %v233 = vadd.f32 %v59, %v232
  %234 = vmatprep.mubr.f32.mxu0 0.0
  %235 = vmatmul.mubr.f32.gmra.mrb[0].mxu0 %v93
  %v236 = vpop.f32.mrb[0].mxu0
  %v237 = vadd.f32 %v55, %v236
  %v238 = vpop.f32.mrb[0].mxu0
  %v239 = vadd.f32 %v59, %v238
  %240 = vmatprep.mubr.f32.mxu0 0.0
  %241 = vmatmul.mubr.f32.gmra.mrb[0].mxu0 %v96
  %v242 = vpop.f32.mrb[0].mxu0
  %v243 = vadd.f32 %v55, %v242
  %v244 = vpop.f32.mrb[0].mxu0
  %v245 = vadd.f32 %v59, %v244
  %246 = vmatprep.mubr.f32.mxu0 0.0
  %247 = vmatmul.mubr.f32.gmra.mrb[0].mxu0 %v99
  %v248 = vpop.f32.mrb[0].mxu0
  %v249 = vadd.f32 %v55, %v248
  %v250 = vpop.f32.mrb[0].mxu0
  %v251 = vadd.f32 %v59, %v250
  %252 = vmatprep.mubr.f32.mxu0 0.0
  %253 = vmatmul.mubr.f32.gmra.mrb[0].mxu0 %v102
  %v254 = vpop.f32.mrb[0].mxu0
  %v255 = vadd.f32 %v55, %v254
  %v256 = vpop.f32.mrb[0].mxu0
  %v257 = vadd.f32 %v59, %v256
  %258 = vmatprep.mubr.f32.mxu0 0.0
  %259 = vmatmul.mubr.f32.gmra.mrb[0].mxu0 %v105
  %v260 = vpop.f32.mrb[0].mxu0
  %v261 = vadd.f32 %v55, %v260
  %v262 = vpop.f32.mrb[0].mxu0
  %v263 = vadd.f32 %v59, %v262
  %264 = vmatprep.mubr.f32.mxu0 0.0
  %265 = vmatmul.mubr.f32.gmra.mrb[0].mxu0 %v108
  %v266 = vpop.f32.mrb[0].mxu0
  %v267 = vadd.f32 %v55, %v266
  %v268 = vpop.f32.mrb[0].mxu0
  %v269 = vadd.f32 %v59, %v268
  %270 = vmatprep.mubr.f32.mxu0 0.0
  %271 = vmatmul.mubr.f32.gmra.mrb[0].mxu0 %v111
  %v272 = vpop.f32.mrb[0].mxu0
  %v273 = vadd.f32 %v55, %v272
  %v274 = vpop.f32.mrb[0].mxu0
  %v275 = vadd.f32 %v59, %v274
  %276 = vmatprep.mubr.f32.mxu0 0.0
  %277 = vmatmul.mubr.f32.gmra.mrb[0].mxu0 %v114
  %v278 = vpop.f32.mrb[0].mxu0
  %v279 = vadd.f32 %v55, %v278
  %v280 = vpop.f32.mrb[0].mxu0
  %v281 = vadd.f32 %v59, %v280
  %282 = vmatprep.mubr.f32.mxu0 0.0
  %283 = vmatmul.mubr.f32.gmra.mrb[0].mxu0 %v117
  %v284 = vpop.f32.mrb[0].mxu0
  %v285 = vadd.f32 %v55, %v284
  %v286 = vpop.f32.mrb[0].mxu0
  %v287 = vadd.f32 %v59, %v286
  %288 = vmatprep.mubr.f32.mxu0 0.0
  %289 = vmatmul.mubr.f32.gmra.mrb[0].mxu0 %v120
  %v290 = vpop.f32.mrb[0].mxu0
  %v291 = vadd.f32 %v55, %v290
  %v292 = vpop.f32.mrb[0].mxu0
  %v293 = vadd.f32 %v59, %v292
  %294 = vdwg.mxu0
  %295 = vmatprep.subr.mxu0 0.0
  %296 = vmatpush1.msra.mxu0 %v34
  %297 = vmatprep.subr.mxu0 0.0
  %298 = vmatpush1.msra.mxu0 %v37
  %299 = vmatprep.subr.mxu0 0.0
  %300 = vmatpush1.msra.mxu0 %v40
  %301 = vmatprep.subr.mxu0 0.0
  %302 = vmatpush1.msra.mxu0 %v43
  %303 = vmatprep.subr.mxu0 0.0
  %304 = vmatpush1.msra.mxu0 %v46
  %305 = vmatprep.subr.mxu0 0.0
  %306 = vmatpush1.msra.mxu0 %v49
  %307 = vmatprep.subr.mxu0 0.0
  %308 = vmatpush1.msra.mxu0 0.0
  %309 = vmatprep.subr.mxu0 0.0
  %310 = vmatpush1.msra.mxu0 0.0
  %311 = vmatprep.subr.mxu0 0.0
  %312 = vmatpush1.msra.mxu0 0.0
  %313 = vmatprep.subr.mxu0 0.0
  %314 = vmatpush1.msra.mxu0 0.0
  %315 = vmatprep.subr.mxu0 0.0
  %316 = vmatpush1.msra.mxu0 0.0
  %317 = vmatprep.subr.mxu0 0.0
  %318 = vmatpush1.msra.mxu0 0.0
  %319 = vmatprep.subr.mxu0 0.0
  %320 = vmatpush1.msra.mxu0 0.0
  %321 = vmatprep.subr.mxu0 0.0
  %322 = vmatpush1.msra.mxu0 0.0
  %323 = vmatprep.subr.mxu0 0.0
  %324 = vmatpush1.msra.mxu0 0.0
  %325 = vmatprep.subr.mxu0 0.0
  %326 = vmatpush1.msra.mxu0 0.0
  %327 = vmatprep.subr.mxu0 0.0
  %328 = vmatpush1.msra.mxu0 0.0
  %329 = vmatprep.subr.mxu0 0.0
  %330 = vmatpush1.msra.mxu0 0.0
  %331 = vmatprep.subr.mxu0 0.0
  %332 = vmatpush1.msra.mxu0 0.0
  %333 = vmatprep.subr.mxu0 0.0
  %334 = vmatpush1.msra.mxu0 0.0
  %335 = vmatprep.subr.mxu0 0.0
  %336 = vmatpush1.msra.mxu0 0.0
  %337 = vmatprep.subr.mxu0 0.0
  %338 = vmatpush1.msra.mxu0 0.0
  %339 = vmatprep.subr.mxu0 0.0
  %340 = vmatpush1.msra.mxu0 0.0
  %341 = vmatprep.subr.mxu0 0.0
  %342 = vmatpush1.msra.mxu0 0.0
  %343 = vmatprep.subr.mxu0 0.0
  %344 = vmatpush1.msra.mxu0 0.0
  %345 = vmatprep.subr.mxu0 0.0
  %346 = vmatpush1.msra.mxu0 0.0
  %347 = vmatprep.subr.mxu0 0.0
  %348 = vmatpush1.msra.mxu0 0.0
  %349 = vmatprep.subr.mxu0 0.0
  %350 = vmatpush1.msra.mxu0 0.0
  %351 = vmatprep.subr.mxu0 0.0
  %352 = vmatpush1.msra.mxu0 0.0
  %353 = vmatprep.subr.mxu0 0.0
  %354 = vmatpush1.msra.mxu0 0.0
  %355 = vmatprep.subr.mxu0 0.0
  %356 = vmatpush1.msra.mxu0 0.0
  %357 = vmatprep.subr.mxu0 0.0
  %358 = vmatpush1.msra.mxu0 0.0
  %359 = vmatprep.mubr.f32.mxu0 0.0
  %360 = vmatmul.mubr.f32.gmra.mrb[0].mxu0 %v69
  %v361 = vpop.f32.mrb[0].mxu0
  %v362 = vadd.f32 %v63, %v361
  %v363 = vpop.f32.mrb[0].mxu0
  %364 = vmatprep.mubr.f32.mxu0 0.0
  %365 = vmatmul.mubr.f32.gmra.mrb[0].mxu0 %v72
  %v366 = vpop.f32.mrb[0].mxu0
  %v367 = vadd.f32 %v63, %v366
  %v368 = vpop.f32.mrb[0].mxu0
  %369 = vmatprep.mubr.f32.mxu0 0.0
  %370 = vmatmul.mubr.f32.gmra.mrb[0].mxu0 %v75
  %v371 = vpop.f32.mrb[0].mxu0
  %v372 = vadd.f32 %v63, %v371
  %v373 = vpop.f32.mrb[0].mxu0
  %374 = vmatprep.mubr.f32.mxu0 0.0
  %375 = vmatmul.mubr.f32.gmra.mrb[0].mxu0 %v78
  %v376 = vpop.f32.mrb[0].mxu0
  %v377 = vadd.f32 %v63, %v376
  %v378 = vpop.f32.mrb[0].mxu0
  %379 = vmatprep.mubr.f32.mxu0 0.0
  %380 = vmatmul.mubr.f32.gmra.mrb[0].mxu0 %v81
  %v381 = vpop.f32.mrb[0].mxu0
  %v382 = vadd.f32 %v63, %v381
  %v383 = vpop.f32.mrb[0].mxu0
  %384 = vmatprep.mubr.f32.mxu0 0.0
  %385 = vmatmul.mubr.f32.gmra.mrb[0].mxu0 %v84
  %v386 = vpop.f32.mrb[0].mxu0
  %v387 = vadd.f32 %v63, %v386
  %v388 = vpop.f32.mrb[0].mxu0
  %389 = vmatprep.mubr.f32.mxu0 0.0
  %390 = vmatmul.mubr.f32.gmra.mrb[0].mxu0 %v87
  %v391 = vpop.f32.mrb[0].mxu0
  %v392 = vadd.f32 %v63, %v391
  %v393 = vpop.f32.mrb[0].mxu0
  %394 = vmatprep.mubr.f32.mxu0 0.0
  %395 = vmatmul.mubr.f32.gmra.mrb[0].mxu0 %v90
  %v396 = vpop.f32.mrb[0].mxu0
  %v397 = vadd.f32 %v63, %v396
  %v398 = vpop.f32.mrb[0].mxu0
  %399 = vmatprep.mubr.f32.mxu0 0.0
  %400 = vmatmul.mubr.f32.gmra.mrb[0].mxu0 %v93
  %v401 = vpop.f32.mrb[0].mxu0
  %v402 = vadd.f32 %v63, %v401
  %v403 = vpop.f32.mrb[0].mxu0
  %404 = vmatprep.mubr.f32.mxu0 0.0
  %405 = vmatmul.mubr.f32.gmra.mrb[0].mxu0 %v96
  %v406 = vpop.f32.mrb[0].mxu0
  %v407 = vadd.f32 %v63, %v406
  %v408 = vpop.f32.mrb[0].mxu0
  %409 = vmatprep.mubr.f32.mxu0 0.0
  %410 = vmatmul.mubr.f32.gmra.mrb[0].mxu0 %v99
  %v411 = vpop.f32.mrb[0].mxu0
  %v412 = vadd.f32 %v63, %v411
  %v413 = vpop.f32.mrb[0].mxu0
  %414 = vmatprep.mubr.f32.mxu0 0.0
  %415 = vmatmul.mubr.f32.gmra.mrb[0].mxu0 %v102
  %v416 = vpop.f32.mrb[0].mxu0
  %v417 = vadd.f32 %v63, %v416
  %v418 = vpop.f32.mrb[0].mxu0
  %419 = vmatprep.mubr.f32.mxu0 0.0
  %420 = vmatmul.mubr.f32.gmra.mrb[0].mxu0 %v105
  %v421 = vpop.f32.mrb[0].mxu0
  %v422 = vadd.f32 %v63, %v421
  %v423 = vpop.f32.mrb[0].mxu0
  %424 = vmatprep.mubr.f32.mxu0 0.0
  %425 = vmatmul.mubr.f32.gmra.mrb[0].mxu0 %v108
  %v426 = vpop.f32.mrb[0].mxu0
  %v427 = vadd.f32 %v63, %v426
  %v428 = vpop.f32.mrb[0].mxu0
  %429 = vmatprep.mubr.f32.mxu0 0.0
  %430 = vmatmul.mubr.f32.gmra.mrb[0].mxu0 %v111
  %v431 = vpop.f32.mrb[0].mxu0
  %v432 = vadd.f32 %v63, %v431
  %v433 = vpop.f32.mrb[0].mxu0
  %434 = vmatprep.mubr.f32.mxu0 0.0
  %435 = vmatmul.mubr.f32.gmra.mrb[0].mxu0 %v114
  %v436 = vpop.f32.mrb[0].mxu0
  %v437 = vadd.f32 %v63, %v436
  %v438 = vpop.f32.mrb[0].mxu0
  %439 = vmatprep.mubr.f32.mxu0 0.0
  %440 = vmatmul.mubr.f32.gmra.mrb[0].mxu0 %v117
  %v441 = vpop.f32.mrb[0].mxu0
  %v442 = vadd.f32 %v63, %v441
  %v443 = vpop.f32.mrb[0].mxu0
  %444 = vmatprep.mubr.f32.mxu0 0.0
  %445 = vmatmul.mubr.f32.gmra.mrb[0].mxu0 %v120
  %v446 = vpop.f32.mrb[0].mxu0
  %v447 = vadd.f32 %v63, %v446
  %v448 = vpop.f32.mrb[0].mxu0
  %449 = vdwg.mxu0
  %450 = vst [vmem:[%s3] sm:$0xff] %v189
  %451 = vst [vmem:[%s3 + $0x8] sm:$0xff] %v191
  %vm452 = vcmask 261120
  %453 = vst.msk [vmem:[%s3 + $0x10] sm:$0xff] %vm452, %v362
  %454 = vst [vmem:[%s3 + $0x18] sm:$0xff] %v195
  %455 = vst [vmem:[%s3 + $0x20] sm:$0xff] %v197
  %456 = vst.msk [vmem:[%s3 + $0x28] sm:$0xff] %vm452, %v367
  %457 = vst [vmem:[%s3 + $0x30] sm:$0xff] %v201
  %458 = vst [vmem:[%s3 + $0x38] sm:$0xff] %v203
  %459 = vst.msk [vmem:[%s3 + $0x40] sm:$0xff] %vm452, %v372
  %460 = vst [vmem:[%s3 + $0x48] sm:$0xff] %v207
  %461 = vst [vmem:[%s3 + $0x50] sm:$0xff] %v209
  %462 = vst.msk [vmem:[%s3 + $0x58] sm:$0xff] %vm452, %v377
  %463 = vst [vmem:[%s3 + $0x60] sm:$0xff] %v213
  %464 = vst [vmem:[%s3 + $0x68] sm:$0xff] %v215
  %465 = vst.msk [vmem:[%s3 + $0x70] sm:$0xff] %vm452, %v382
  %466 = vst [vmem:[%s3 + $0x78] sm:$0xff] %v219
  %467 = vst [vmem:[%s3 + $0x80] sm:$0xff] %v221
  %468 = vst.msk [vmem:[%s3 + $0x88] sm:$0xff] %vm452, %v387
  %469 = vst [vmem:[%s3 + $0x90] sm:$0xff] %v225
  %470 = vst [vmem:[%s3 + $0x98] sm:$0xff] %v227
  %471 = vst.msk [vmem:[%s3 + $0xa0] sm:$0xff] %vm452, %v392
  %472 = vst [vmem:[%s3 + $0xa8] sm:$0xff] %v231
  %473 = vst [vmem:[%s3 + $0xb0] sm:$0xff] %v233
  %474 = vst.msk [vmem:[%s3 + $0xb8] sm:$0xff] %vm452, %v397
  %475 = vst [vmem:[%s3 + $0xc0] sm:$0xff] %v237
  %476 = vst [vmem:[%s3 + $0xc8] sm:$0xff] %v239
  %477 = vst.msk [vmem:[%s3 + $0xd0] sm:$0xff] %vm452, %v402
  %478 = vst [vmem:[%s3 + $0xd8] sm:$0xff] %v243
  %479 = vst [vmem:[%s3 + $0xe0] sm:$0xff] %v245
  %480 = vst.msk [vmem:[%s3 + $0xe8] sm:$0xff] %vm452, %v407
  %481 = vst [vmem:[%s3 + $0xf0] sm:$0xff] %v249
  %482 = vst [vmem:[%s3 + $0xf8] sm:$0xff] %v251
  %483 = vst.msk [vmem:[%s3 + $0x100] sm:$0xff] %vm452, %v412
  %484 = vst [vmem:[%s3 + $0x108] sm:$0xff] %v255
  %485 = vst [vmem:[%s3 + $0x110] sm:$0xff] %v257
  %486 = vst.msk [vmem:[%s3 + $0x118] sm:$0xff] %vm452, %v417
  %487 = vst [vmem:[%s3 + $0x120] sm:$0xff] %v261
  %488 = vst [vmem:[%s3 + $0x128] sm:$0xff] %v263
  %489 = vst.msk [vmem:[%s3 + $0x130] sm:$0xff] %vm452, %v422
  %490 = vst [vmem:[%s3 + $0x138] sm:$0xff] %v267
  %491 = vst [vmem:[%s3 + $0x140] sm:$0xff] %v269
  %492 = vst.msk [vmem:[%s3 + $0x148] sm:$0xff] %vm452, %v427
  %493 = vst [vmem:[%s3 + $0x150] sm:$0xff] %v273
  %494 = vst [vmem:[%s3 + $0x158] sm:$0xff] %v275
  %495 = vst.msk [vmem:[%s3 + $0x160] sm:$0xff] %vm452, %v432
  %496 = vst [vmem:[%s3 + $0x168] sm:$0xff] %v279
  %497 = vst [vmem:[%s3 + $0x170] sm:$0xff] %v281
  %498 = vst.msk [vmem:[%s3 + $0x178] sm:$0xff] %vm452, %v437
  %499 = vst [vmem:[%s3 + $0x180] sm:$0xff] %v285
  %500 = vst [vmem:[%s3 + $0x188] sm:$0xff] %v287
  %501 = vst.msk [vmem:[%s3 + $0x190] sm:$0xff] %vm452, %v442
  %502 = vst [vmem:[%s3 + $0x198] sm:$0xff] %v291
  %503 = vst [vmem:[%s3 + $0x1a0] sm:$0xff] %v293
  %504 = vst.msk [vmem:[%s3 + $0x1a8] sm:$0xff] %vm452, %v447
  // Predicated region
  $region14: #{_forward_impl.11} parent=0 // pred_check
    _
  $region15: #{_forward_impl.11} parent=0 // pred_check_branch
    %506 = sbr.rel (0) target = $region17
  $region16: #{_forward_impl.11} parent=0 // pred_region
    _
  $region17: #{_forward_impl.11} parent=0 // pred_fallthru
    _
  // Predicated region
  $region18: #{_forward_impl.11} parent=0 // pred_check
    _
  $region19: #{_forward_impl.11} parent=0 // pred_check_branch
    %508 = sbr.rel (0) target = $region21
  $region20: #{_forward_impl.11} parent=0 // pred_region
    _
  $region21: #{_forward_impl.11} parent=0 // pred_fallthru
    _

// kernel: _forward_impl.13
$region0: #{_forward_impl.13}
  #allocation0 [shape = 'u32[]', space=smem, size = 0x4, offset = 0x4, fixed_abs, tag = 'smem constant byte address 0x4 - core index']
  #allocation1 [shape = 'u32[144,128]{1,0:T(1,128)}', space=vmem, size = 0x12000, scoped, tag = 'internal scratch']
  %s0 = inlined_call_operand.vmem [shape: f32[144,48], index: 0, kind: input, shape index: {}]
  %s1 = inlined_call_operand.vmem [shape: f32[48,96], index: 1, kind: input, shape index: {}]
  %s2 = inlined_call_operand.vmem [shape: f32[1,96], index: 2, kind: input, shape index: {}]
  %s3 = inlined_call_operand.vmem [shape: f32[144,96], index: 3, kind: output, shape index: {}]
  %s4 = sld [smem:[#allocation0]]
  $region22: #{_forward_impl.13} parent=0
    _
  %s6 = ssub.s32 1, %s4
  %s7 = scalar_select 0, %s6, %s4
  // Predicated region
  $region2: #{_forward_impl.13} parent=0 // pred_check
    _
  $region3: #{_forward_impl.13} parent=0 // pred_check_branch
    %9 = sbr.rel (0) target = $region5
  $region4: #{_forward_impl.13} parent=0 // pred_region
    _
  $region5: #{_forward_impl.13} parent=0 // pred_fallthru
    _
  // Predicated region
  $region6: #{_forward_impl.13} parent=0 // pred_check
    _
  $region7: #{_forward_impl.13} parent=0 // pred_check_branch
    %11 = sbr.rel (0) target = $region9
  $region8: #{_forward_impl.13} parent=0 // pred_region
    _
  $region9: #{_forward_impl.13} parent=0 // pred_fallthru
    _
  // Predicated region
  $region10: #{_forward_impl.13} parent=0 // pred_check
    _
  $region11: #{_forward_impl.13} parent=0 // pred_check_branch
    %13 = sbr.rel (0) target = $region13
  $region12: #{_forward_impl.13} parent=0 // pred_region
    _
  $region13: #{_forward_impl.13} parent=0 // pred_fallthru
    _
  %v14 = vld [vmem:[%s0] sm:$0xff]
  %v15 = vld [vmem:[%s0 + $0x8] sm:$0xff]
  %v16 = vld [vmem:[%s0 + $0x10] sm:$0xff]
  %v17 = vld [vmem:[%s0 + $0x18] sm:$0xff]
  %v18 = vld [vmem:[%s0 + $0x20] sm:$0xff]
  %v19 = vld [vmem:[%s0 + $0x28] sm:$0xff]
  %v20 = vld [vmem:[%s0 + $0x30] sm:$0xff]
  %v21 = vld [vmem:[%s0 + $0x38] sm:$0xff]
  %v22 = vld [vmem:[%s0 + $0x40] sm:$0xff]
  %v23 = vld [vmem:[%s0 + $0x48] sm:$0xff]
  %v24 = vld [vmem:[%s0 + $0x50] sm:$0xff]
  %v25 = vld [vmem:[%s0 + $0x58] sm:$0xff]
  %v26 = vld [vmem:[%s0 + $0x60] sm:$0xff]
  %v27 = vld [vmem:[%s0 + $0x68] sm:$0xff]
  %v28 = vld [vmem:[%s0 + $0x70] sm:$0xff]
  %v29 = vld [vmem:[%s0 + $0x78] sm:$0xff]
  %v30 = vld [vmem:[%s0 + $0x80] sm:$0xff]
  %v31 = vld [vmem:[%s0 + $0x88] sm:$0xff]
  %v32 = vld [vmem:[%s1] sm:$0xff]
  %v33 = vld [vmem:[%s1 + $0x8] sm:$0xff]
  %v34 = vld [vmem:[%s1 + $0x10] sm:$0xff]
  %v35 = vld [vmem:[%s1 + $0x18] sm:$0xff]
  %v36 = vld [vmem:[%s1 + $0x20] sm:$0xff]
  %v37 = vld [vmem:[%s1 + $0x28] sm:$0xff]
  %v38 = vld [vmem:[%s2] sm:$0x1]
  %v40 = vlaneseq
  %v41 = vshrl.u32 %v40, 7
  %v42 = vsub.s32 0, %v41
  %v43 = vrot.slane %v38, %v42
  %vm45 = vcmask 392192
  %v47 = vsel %vm45, %v14, 0
  %v50 = vsel %vm45, %v15, 0
  %v53 = vsel %vm45, %v16, 0
  %v56 = vsel %vm45, %v17, 0
  %v59 = vsel %vm45, %v18, 0
  %v62 = vsel %vm45, %v19, 0
  %v65 = vsel %vm45, %v20, 0
  %v68 = vsel %vm45, %v21, 0
  %v71 = vsel %vm45, %v22, 0
  %v74 = vsel %vm45, %v23, 0
  %v77 = vsel %vm45, %v24, 0
  %v80 = vsel %vm45, %v25, 0
  %v83 = vsel %vm45, %v26, 0
  %v86 = vsel %vm45, %v27, 0
  %v89 = vsel %vm45, %v28, 0
  %v92 = vsel %vm45, %v29, 0
  %v95 = vsel %vm45, %v30, 0
  %v98 = vsel %vm45, %v31, 0
  %100 = vmatprep.subr.mxu0 0.0
  %101 = vmatpush1.msra.mxu0 %v32
  %102 = vmatprep.subr.mxu0 0.0
  %103 = vmatpush1.msra.mxu0 %v33
  %104 = vmatprep.subr.mxu0 0.0
  %105 = vmatpush1.msra.mxu0 %v34
  %106 = vmatprep.subr.mxu0 0.0
  %107 = vmatpush1.msra.mxu0 %v35
  %108 = vmatprep.subr.mxu0 0.0
  %109 = vmatpush1.msra.mxu0 %v36
  %110 = vmatprep.subr.mxu0 0.0
  %111 = vmatpush1.msra.mxu0 %v37
  %112 = vmatprep.subr.mxu0 0.0
  %113 = vmatpush1.msra.mxu0 0.0
  %114 = vmatprep.subr.mxu0 0.0
  %115 = vmatpush1.msra.mxu0 0.0
  %116 = vmatprep.subr.mxu0 0.0
  %117 = vmatpush1.msra.mxu0 0.0
  %118 = vmatprep.subr.mxu0 0.0
  %119 = vmatpush1.msra.mxu0 0.0
  %120 = vmatprep.subr.mxu0 0.0
  %121 = vmatpush1.msra.mxu0 0.0
  %122 = vmatprep.subr.mxu0 0.0
  %123 = vmatpush1.msra.mxu0 0.0
  %124 = vmatprep.subr.mxu0 0.0
  %125 = vmatpush1.msra.mxu0 0.0
  %126 = vmatprep.subr.mxu0 0.0
  %127 = vmatpush1.msra.mxu0 0.0
  %128 = vmatprep.subr.mxu0 0.0
  %129 = vmatpush1.msra.mxu0 0.0
  %130 = vmatprep.subr.mxu0 0.0
  %131 = vmatpush1.msra.mxu0 0.0
  %132 = vmatprep.subr.mxu0 0.0
  %133 = vmatpush1.msra.mxu0 0.0
  %134 = vmatprep.subr.mxu0 0.0
  %135 = vmatpush1.msra.mxu0 0.0
  %136 = vmatprep.subr.mxu0 0.0
  %137 = vmatpush1.msra.mxu0 0.0
  %138 = vmatprep.subr.mxu0 0.0
  %139 = vmatpush1.msra.mxu0 0.0
  %140 = vmatprep.subr.mxu0 0.0
  %141 = vmatpush1.msra.mxu0 0.0
  %142 = vmatprep.subr.mxu0 0.0
  %143 = vmatpush1.msra.mxu0 0.0
  %144 = vmatprep.subr.mxu0 0.0
  %145 = vmatpush1.msra.mxu0 0.0
  %146 = vmatprep.subr.mxu0 0.0
  %147 = vmatpush1.msra.mxu0 0.0
  %148 = vmatprep.subr.mxu0 0.0
  %149 = vmatpush1.msra.mxu0 0.0
  %150 = vmatprep.subr.mxu0 0.0
  %151 = vmatpush1.msra.mxu0 0.0
  %152 = vmatprep.subr.mxu0 0.0
  %153 = vmatpush1.msra.mxu0 0.0
  %154 = vmatprep.subr.mxu0 0.0
  %155 = vmatpush1.msra.mxu0 0.0
  %156 = vmatprep.subr.mxu0 0.0
  %157 = vmatpush1.msra.mxu0 0.0
  %158 = vmatprep.subr.mxu0 0.0
  %159 = vmatpush1.msra.mxu0 0.0
  %160 = vmatprep.subr.mxu0 0.0
  %161 = vmatpush1.msra.mxu0 0.0
  %162 = vmatprep.subr.mxu0 0.0
  %163 = vmatpush1.msra.mxu0 0.0
  %164 = vmatprep.mubr.f32.mxu0 0.0
  %165 = vmatmul.mubr.f32.gmra.mrb[0].mxu0 %v47
  %v166 = vpop.f32.mrb[0].mxu0
  %v167 = vadd.f32 %v43, %v166
  %v168 = vpop.f32.mrb[0].mxu0
  %169 = vmatprep.mubr.f32.mxu0 0.0
  %170 = vmatmul.mubr.f32.gmra.mrb[0].mxu0 %v50
  %v171 = vpop.f32.mrb[0].mxu0
  %v172 = vadd.f32 %v43, %v171
  %v173 = vpop.f32.mrb[0].mxu0
  %174 = vmatprep.mubr.f32.mxu0 0.0
  %175 = vmatmul.mubr.f32.gmra.mrb[0].mxu0 %v53
  %v176 = vpop.f32.mrb[0].mxu0
  %v177 = vadd.f32 %v43, %v176
  %v178 = vpop.f32.mrb[0].mxu0
  %179 = vmatprep.mubr.f32.mxu0 0.0
  %180 = vmatmul.mubr.f32.gmra.mrb[0].mxu0 %v56
  %v181 = vpop.f32.mrb[0].mxu0
  %v182 = vadd.f32 %v43, %v181
  %v183 = vpop.f32.mrb[0].mxu0
  %184 = vmatprep.mubr.f32.mxu0 0.0
  %185 = vmatmul.mubr.f32.gmra.mrb[0].mxu0 %v59
  %v186 = vpop.f32.mrb[0].mxu0
  %v187 = vadd.f32 %v43, %v186
  %v188 = vpop.f32.mrb[0].mxu0
  %189 = vmatprep.mubr.f32.mxu0 0.0
  %190 = vmatmul.mubr.f32.gmra.mrb[0].mxu0 %v62
  %v191 = vpop.f32.mrb[0].mxu0
  %v192 = vadd.f32 %v43, %v191
  %v193 = vpop.f32.mrb[0].mxu0
  %194 = vmatprep.mubr.f32.mxu0 0.0
  %195 = vmatmul.mubr.f32.gmra.mrb[0].mxu0 %v65
  %v196 = vpop.f32.mrb[0].mxu0
  %v197 = vadd.f32 %v43, %v196
  %v198 = vpop.f32.mrb[0].mxu0
  %199 = vmatprep.mubr.f32.mxu0 0.0
  %200 = vmatmul.mubr.f32.gmra.mrb[0].mxu0 %v68
  %v201 = vpop.f32.mrb[0].mxu0
  %v202 = vadd.f32 %v43, %v201
  %v203 = vpop.f32.mrb[0].mxu0
  %204 = vmatprep.mubr.f32.mxu0 0.0
  %205 = vmatmul.mubr.f32.gmra.mrb[0].mxu0 %v71
  %v206 = vpop.f32.mrb[0].mxu0
  %v207 = vadd.f32 %v43, %v206
  %v208 = vpop.f32.mrb[0].mxu0
  %209 = vmatprep.mubr.f32.mxu0 0.0
  %210 = vmatmul.mubr.f32.gmra.mrb[0].mxu0 %v74
  %v211 = vpop.f32.mrb[0].mxu0
  %v212 = vadd.f32 %v43, %v211
  %v213 = vpop.f32.mrb[0].mxu0
  %214 = vmatprep.mubr.f32.mxu0 0.0
  %215 = vmatmul.mubr.f32.gmra.mrb[0].mxu0 %v77
  %v216 = vpop.f32.mrb[0].mxu0
  %v217 = vadd.f32 %v43, %v216
  %v218 = vpop.f32.mrb[0].mxu0
  %219 = vmatprep.mubr.f32.mxu0 0.0
  %220 = vmatmul.mubr.f32.gmra.mrb[0].mxu0 %v80
  %v221 = vpop.f32.mrb[0].mxu0
  %v222 = vadd.f32 %v43, %v221
  %v223 = vpop.f32.mrb[0].mxu0
  %224 = vmatprep.mubr.f32.mxu0 0.0
  %225 = vmatmul.mubr.f32.gmra.mrb[0].mxu0 %v83
  %v226 = vpop.f32.mrb[0].mxu0
  %v227 = vadd.f32 %v43, %v226
  %v228 = vpop.f32.mrb[0].mxu0
  %229 = vmatprep.mubr.f32.mxu0 0.0
  %230 = vmatmul.mubr.f32.gmra.mrb[0].mxu0 %v86
  %v231 = vpop.f32.mrb[0].mxu0
  %v232 = vadd.f32 %v43, %v231
  %v233 = vpop.f32.mrb[0].mxu0
  %234 = vmatprep.mubr.f32.mxu0 0.0
  %235 = vmatmul.mubr.f32.gmra.mrb[0].mxu0 %v89
  %v236 = vpop.f32.mrb[0].mxu0
  %v237 = vadd.f32 %v43, %v236
  %v238 = vpop.f32.mrb[0].mxu0
  %239 = vmatprep.mubr.f32.mxu0 0.0
  %240 = vmatmul.mubr.f32.gmra.mrb[0].mxu0 %v92
  %v241 = vpop.f32.mrb[0].mxu0
  %v242 = vadd.f32 %v43, %v241
  %v243 = vpop.f32.mrb[0].mxu0
  %244 = vmatprep.mubr.f32.mxu0 0.0
  %245 = vmatmul.mubr.f32.gmra.mrb[0].mxu0 %v95
  %v246 = vpop.f32.mrb[0].mxu0
  %v247 = vadd.f32 %v43, %v246
  %v248 = vpop.f32.mrb[0].mxu0
  %249 = vmatprep.mubr.f32.mxu0 0.0
  %250 = vmatmul.mubr.f32.gmra.mrb[0].mxu0 %v98
  %v251 = vpop.f32.mrb[0].mxu0
  %v252 = vadd.f32 %v43, %v251
  %v253 = vpop.f32.mrb[0].mxu0
  %254 = vdwg.mxu0
  %vm255 = vcmask 785408
  %256 = vst.msk [vmem:[%s3] sm:$0xff] %vm255, %v167
  %257 = vst.msk [vmem:[%s3 + $0x8] sm:$0xff] %vm255, %v172
  %258 = vst.msk [vmem:[%s3 + $0x10] sm:$0xff] %vm255, %v177
  %259 = vst.msk [vmem:[%s3 + $0x18] sm:$0xff] %vm255, %v182
  %260 = vst.msk [vmem:[%s3 + $0x20] sm:$0xff] %vm255, %v187
  %261 = vst.msk [vmem:[%s3 + $0x28] sm:$0xff] %vm255, %v192
  %262 = vst.msk [vmem:[%s3 + $0x30] sm:$0xff] %vm255, %v197
  %263 = vst.msk [vmem:[%s3 + $0x38] sm:$0xff] %vm255, %v202
  %264 = vst.msk [vmem:[%s3 + $0x40] sm:$0xff] %vm255, %v207
  %265 = vst.msk [vmem:[%s3 + $0x48] sm:$0xff] %vm255, %v212
  %266 = vst.msk [vmem:[%s3 + $0x50] sm:$0xff] %vm255, %v217
  %267 = vst.msk [vmem:[%s3 + $0x58] sm:$0xff] %vm255, %v222
  %268 = vst.msk [vmem:[%s3 + $0x60] sm:$0xff] %vm255, %v227
  %269 = vst.msk [vmem:[%s3 + $0x68] sm:$0xff] %vm255, %v232
  %270 = vst.msk [vmem:[%s3 + $0x70] sm:$0xff] %vm255, %v237
  %271 = vst.msk [vmem:[%s3 + $0x78] sm:$0xff] %vm255, %v242
  %272 = vst.msk [vmem:[%s3 + $0x80] sm:$0xff] %vm255, %v247
  %273 = vst.msk [vmem:[%s3 + $0x88] sm:$0xff] %vm255, %v252
  // Predicated region
  $region14: #{_forward_impl.13} parent=0 // pred_check
    _
  $region15: #{_forward_impl.13} parent=0 // pred_check_branch
    %275 = sbr.rel (0) target = $region17
  $region16: #{_forward_impl.13} parent=0 // pred_region
    _
  $region17: #{_forward_impl.13} parent=0 // pred_fallthru
    _
  // Predicated region
  $region18: #{_forward_impl.13} parent=0 // pred_check
    _
  $region19: #{_forward_impl.13} parent=0 // pred_check_branch
    %277 = sbr.rel (0) target = $region21
  $region20: #{_forward_impl.13} parent=0 // pred_region
    _
  $region21: #{_forward_impl.13} parent=0 // pred_fallthru
    _

</llo_original>
